<compile_context>
chip_gen: v6e
topology: v6e:2x2x1
jax: 0.10.0
libtpu: 0.0.40
codegen_flags: <defaults>
</compile_context>

<pallas_src>
import jax
import jax.numpy as jnp
from jax.experimental import pallas as pl
from jax.experimental.pallas import tpu as pltpu

HIDDEN = 512


def _round_up(x, m):
    return ((x + m - 1) // m) * m


def dqnff_kernel(x_ref, w1_ref, b1_ref,
                 w2v_ref, b2v_ref, w2a_ref, b2a_ref,
                 w3v_ref, b3v_ref, w3a_ref, b3a_ref,
                 q_ref, adv_ref):
    x = x_ref[...].astype(jnp.bfloat16)                       # (TB, obs) bf16

    # ---- layer 1: both heads fused along N: (TB, obs) @ (obs, 2H) ----
    h1 = jnp.dot(x, w1_ref[...], preferred_element_type=jnp.float32)
    h1 = jnp.maximum(h1 + b1_ref[...], 0.0)                   # (TB, 2H) f32
    hv = h1[:, :HIDDEN].astype(jnp.bfloat16)                  # lane-aligned slices
    ha = h1[:, HIDDEN:].astype(jnp.bfloat16)

    # ---- layer 2: separate 512x512 weights per head ----
    hv = jnp.maximum(
        jnp.dot(hv, w2v_ref[...], preferred_element_type=jnp.float32)
        + b2v_ref[...], 0.0)                                  # (TB, H) f32
    ha = jnp.maximum(
        jnp.dot(ha, w2a_ref[...], preferred_element_type=jnp.float32)
        + b2a_ref[...], 0.0)                                  # (TB, H) f32

    # ---- layer 3: two small dots; adv lane-aligned with the output ----
    val = jnp.dot(hv.astype(jnp.bfloat16), w3v_ref[...],
                  preferred_element_type=jnp.float32) + b3v_ref[...]   # (TB, 1)
    adv = jnp.dot(ha.astype(jnp.bfloat16), w3a_ref[...],
                  preferred_element_type=jnp.float32) + b3a_ref[...]   # (TB, A)

    adv_ref[...] = adv
    # Global adv.mean() (over ALL B*A elements, like torch's adv.mean()) is
    # subtracted outside the kernel so batch tiles stay fully independent.
    q_ref[...] = val + adv


def prepare_params(p):
    """One-time (per checkpoint) fusion + bf16 cast of the raw f32 params."""
    w1 = jnp.concatenate([p["w1v"], p["w1a"]], axis=1).astype(jnp.bfloat16)  # (obs, 2H)
    b1 = jnp.concatenate([p["b1v"], p["b1a"]], axis=1)                       # (1, 2H) f32
    return dict(
        w1=w1, b1=b1,
        w2v=p["w2v"].astype(jnp.bfloat16), b2v=p["b2v"],
        w2a=p["w2a"].astype(jnp.bfloat16), b2a=p["b2a"],
        w3v=p["w3v"].astype(jnp.bfloat16), b3v=p["b3v"],
        w3a=p["w3a"].astype(jnp.bfloat16), b3a=p["b3a"],
    )


def dqnff_forward(x, fused, actions_n, *, tile_b=128):
    """x: (B, obs_len) f32.  fused: output of prepare_params().

    tile_b: batch rows per grid step.  Production: 128 on v5e, 256 on v6e/v7x.
    """
    B, obs = x.shape
    A = actions_n

    tile_b = _round_up(max(1, min(tile_b, B)), 8)   # f32 sublane tile is 8 rows
    b_pad = _round_up(B, tile_b)
    if b_pad != B:
        x = jnp.pad(x, ((0, b_pad - B), (0, 0)))
    num_tiles = b_pad // tile_b

    weights = [
        fused["w1"], fused["b1"],
        fused["w2v"], fused["b2v"], fused["w2a"], fused["b2a"],
        fused["w3v"], fused["b3v"], fused["w3a"], fused["b3a"],
    ]

    # Weights / biases: full-array blocks with a constant index_map, so they
    # are DMA'd into VMEM once and stay resident across all batch tiles.
    def resident_spec(arr):
        nd = arr.ndim
        return pl.BlockSpec(arr.shape, (lambda n: (lambda b: (0,) * n))(nd))

    in_specs = [pl.BlockSpec((tile_b, obs), lambda b: (b, 0))] \
             + [resident_spec(w) for w in weights]
    out_specs = [pl.BlockSpec((tile_b, A), lambda b: (b, 0)),
                 pl.BlockSpec((tile_b, A), lambda b: (b, 0))]

    q_raw, adv = pl.pallas_call(
        dqnff_kernel,
        out_shape=(jax.ShapeDtypeStruct((b_pad, A), jnp.float32),
                   jax.ShapeDtypeStruct((b_pad, A), jnp.float32)),
        grid_spec=pltpu.PrefetchScalarGridSpec(
            num_scalar_prefetch=0,
            grid=(num_tiles,),
            in_specs=in_specs,
            out_specs=out_specs,
        ),
        compiler_params=pltpu.CompilerParams(
            # Batch tiles are independent -> shard across v7x's two TCs.
            dimension_semantics=("parallel",),
            vmem_limit_bytes=16 * 1024 * 1024,   # fits v7x (64 MiB physical)
        ),
    )(x, *weights)

    # Finalize: global scalar adv.mean() over the REAL rows only (padding
    # excluded), exactly matching torch's adv.mean() over all B*A elements.
    q_raw = q_raw[:B]
    adv = adv[:B]
    return q_raw - jnp.mean(adv)


def init_params(key, obs_len, actions_n):
    """Deterministic synthetic init; weights are (in, out) = nn.Linear.weight.T."""
    ks = jax.random.split(key, 12)
    s = 0.05

    def lin(kw, kb, fan_in, fan_out):
        w = jax.random.normal(kw, (fan_in, fan_out), jnp.float32) * s
        b = jax.random.normal(kb, (1, fan_out), jnp.float32) * s
        return w, b

    w1v, b1v = lin(ks[0], ks[1], obs_len, HIDDEN)
    w2v, b2v = lin(ks[2], ks[3], HIDDEN, HIDDEN)
    w3v, b3v = lin(ks[4], ks[5], HIDDEN, 1)
    w1a, b1a = lin(ks[6], ks[7], obs_len, HIDDEN)
    w2a, b2a = lin(ks[8], ks[9], HIDDEN, HIDDEN)
    w3a, b3a = lin(ks[10], ks[11], HIDDEN, actions_n)
    return dict(w1v=w1v, b1v=b1v, w2v=w2v, b2v=b2v, w3v=w3v, b3v=b3v,
                w1a=w1a, b1a=b1a, w2a=w2a, b2a=b2a, w3a=w3a, b3a=b3a)


def dqnff_reference_f32(x, p):
    """Pure-f32 JAX reference of the PyTorch forward."""
    def mlp(x, w1, b1, w2, b2, w3, b3):
        h = jnp.maximum(x @ w1 + b1, 0.0)
        h = jnp.maximum(h @ w2 + b2, 0.0)
        return h @ w3 + b3
    val = mlp(x, p["w1v"], p["b1v"], p["w2v"], p["b2v"], p["w3v"], p["b3v"])
    adv = mlp(x, p["w1a"], p["b1a"], p["w2a"], p["b2a"], p["w3a"], p["b3a"])
    return val + adv - adv.mean()


def dqnff_reference_bf16(x, p):
    """Reference at the kernel's precision (bf16 operands, f32 accumulation)."""
    bf = jnp.bfloat16

    def mm(a, w):
        return jnp.dot(a.astype(bf), w.astype(bf),
                       preferred_element_type=jnp.float32)

    def mlp(x, w1, b1, w2, b2, w3, b3):
        h = jnp.maximum(mm(x, w1) + b1, 0.0)
        h = jnp.maximum(mm(h, w2) + b2, 0.0)
        return mm(h, w3) + b3

    val = mlp(x, p["w1v"], p["b1v"], p["w2v"], p["b2v"], p["w3v"], p["b3v"])
    adv = mlp(x, p["w1a"], p["b1a"], p["w2a"], p["b2a"], p["w3a"], p["b3a"])
    return val + adv - adv.mean()


if __name__ == "__main__":
    # Small demo shapes; B=20 with TILE_B=16 exercises the batch grid
    # (grid=(2,)), resident weights, and padded-row masking of the mean.
    B, OBS_LEN, ACTIONS_N = 20, 32, 4
    TILE_B = 16

    key = jax.random.PRNGKey(0)
    kx, kp = jax.random.split(key)
    x = jax.random.normal(kx, (B, OBS_LEN), jnp.float32)
    params = init_params(kp, OBS_LEN, ACTIONS_N)
    fused = prepare_params(params)

    out = dqnff_forward(x, fused, ACTIONS_N, tile_b=TILE_B)
    out = jax.block_until_ready(out)
    assert out.shape == (B, ACTIONS_N)

    # Tight check against a reference at matching (bf16) precision.
    ref_bf16 = dqnff_reference_bf16(x, params)
    err_bf16 = jnp.max(jnp.abs(out - ref_bf16))
    assert jnp.allclose(out, ref_bf16, atol=1e-3, rtol=1e-3), (
        f"bf16-ref max abs err = {err_bf16}")

    # Loose check against the full-f32 reference (bf16 weight quantization).
    ref_f32 = dqnff_reference_f32(x, params)
    err_f32 = jnp.max(jnp.abs(out - ref_f32))
    assert jnp.allclose(out, ref_f32, atol=2e-2, rtol=2e-2), (
        f"f32-ref max abs err = {err_f32}")

    print("KERNEL_OK")
</pallas_src>

<mosaic_0001>
module attributes {stable_mosaic.version = 11 : i64} {
  func.func @dqnff_kernel(%arg0: i32, %arg1: memref<16x32xf32, #tpu.memory_space<vmem>>, %arg2: memref<32x1024xbf16, #tpu.memory_space<vmem>>, %arg3: memref<1x1024xf32, #tpu.memory_space<vmem>>, %arg4: memref<512x512xbf16, #tpu.memory_space<vmem>>, %arg5: memref<1x512xf32, #tpu.memory_space<vmem>>, %arg6: memref<512x512xbf16, #tpu.memory_space<vmem>>, %arg7: memref<1x512xf32, #tpu.memory_space<vmem>>, %arg8: memref<512x1xbf16, #tpu.memory_space<vmem>>, %arg9: memref<1x1xf32, #tpu.memory_space<vmem>>, %arg10: memref<512x4xbf16, #tpu.memory_space<vmem>>, %arg11: memref<1x4xf32, #tpu.memory_space<vmem>>, %arg12: memref<16x4xf32, #tpu.memory_space<vmem>>, %arg13: memref<16x4xf32, #tpu.memory_space<vmem>>) attributes {dimension_semantics = [#tpu.dimension_semantics<parallel>], iteration_bounds = array<i64: 2>, scalar_prefetch = 0 : i64, scratch_operands = 0 : i64, tpu.core_type = #tpu.core_type<tc>, window_params = [{transform_indices = @transform_0, window_bounds = array<i64: 16, 32>}, {pipeline_mode = #tpu.pipeline_mode<synchronous>, transform_indices = @transform_1, window_bounds = array<i64: 32, 1024>}, {pipeline_mode = #tpu.pipeline_mode<synchronous>, transform_indices = @transform_2, window_bounds = array<i64: 1, 1024>}, {pipeline_mode = #tpu.pipeline_mode<synchronous>, transform_indices = @transform_3, window_bounds = array<i64: 512, 512>}, {pipeline_mode = #tpu.pipeline_mode<synchronous>, transform_indices = @transform_4, window_bounds = array<i64: 1, 512>}, {pipeline_mode = #tpu.pipeline_mode<synchronous>, transform_indices = @transform_5, window_bounds = array<i64: 512, 512>}, {pipeline_mode = #tpu.pipeline_mode<synchronous>, transform_indices = @transform_6, window_bounds = array<i64: 1, 512>}, {pipeline_mode = #tpu.pipeline_mode<synchronous>, transform_indices = @transform_7, window_bounds = array<i64: 512, 1>}, {pipeline_mode = #tpu.pipeline_mode<synchronous>, transform_indices = @transform_8, window_bounds = array<i64: 1, 1>}, {pipeline_mode = #tpu.pipeline_mode<synchronous>, transform_indices = @transform_9, window_bounds = array<i64: 512, 4>}, {pipeline_mode = #tpu.pipeline_mode<synchronous>, transform_indices = @transform_10, window_bounds = array<i64: 1, 4>}, {transform_indices = @transform_11, window_bounds = array<i64: 16, 4>}, {transform_indices = @transform_12, window_bounds = array<i64: 16, 4>}]} {
    %c0 = arith.constant 0 : index
    %c0_0 = arith.constant 0 : index
    %0 = vector.load %arg1[%c0, %c0_0] : memref<16x32xf32, #tpu.memory_space<vmem>>, vector<16x32xf32>
    %1 = arith.truncf %0 : vector<16x32xf32> to vector<16x32xbf16>
    %c0_1 = arith.constant 0 : index
    %c0_2 = arith.constant 0 : index
    %2 = vector.load %arg2[%c0_1, %c0_2] : memref<32x1024xbf16, #tpu.memory_space<vmem>>, vector<32x1024xbf16>
    %cst = arith.constant dense<0.000000e+00> : vector<16x1024xf32>
    %3 = tpu.matmul %1, %2, %cst {dimension_numbers = #tpu.dot_dimension_numbers<[1], [0], [0], [1], [0, 0, 1, 1], [], []>} : vector<16x32xbf16>, vector<32x1024xbf16>, vector<16x1024xf32> -> vector<16x1024xf32>
    %c0_3 = arith.constant 0 : index
    %c0_4 = arith.constant 0 : index
    %4 = vector.load %arg3[%c0_3, %c0_4] : memref<1x1024xf32, #tpu.memory_space<vmem>>, vector<1x1024xf32>
    %5 = vector.broadcast %4 : vector<1x1024xf32> to vector<16x1024xf32>
    %6 = arith.addf %3, %5 : vector<16x1024xf32>
    %cst_5 = arith.constant 0.000000e+00 : f32
    %7 = vector.broadcast %cst_5 : f32 to vector<16x1024xf32>
    %8 = arith.maximumf %6, %7 : vector<16x1024xf32>
    %9 = vector.extract_strided_slice %8 {offsets = [0, 0], sizes = [16, 512], strides = [1, 1]} : vector<16x1024xf32> to vector<16x512xf32>
    %10 = arith.truncf %9 : vector<16x512xf32> to vector<16x512xbf16>
    %11 = vector.extract_strided_slice %8 {offsets = [0, 512], sizes = [16, 512], strides = [1, 1]} : vector<16x1024xf32> to vector<16x512xf32>
    %12 = arith.truncf %11 : vector<16x512xf32> to vector<16x512xbf16>
    %c0_6 = arith.constant 0 : index
    %c0_7 = arith.constant 0 : index
    %13 = vector.load %arg4[%c0_6, %c0_7] : memref<512x512xbf16, #tpu.memory_space<vmem>>, vector<512x512xbf16>
    %cst_8 = arith.constant dense<0.000000e+00> : vector<16x512xf32>
    %14 = tpu.matmul %10, %13, %cst_8 {dimension_numbers = #tpu.dot_dimension_numbers<[1], [0], [0], [1], [0, 0, 1, 1], [], []>} : vector<16x512xbf16>, vector<512x512xbf16>, vector<16x512xf32> -> vector<16x512xf32>
    %c0_9 = arith.constant 0 : index
    %c0_10 = arith.constant 0 : index
    %15 = vector.load %arg5[%c0_9, %c0_10] : memref<1x512xf32, #tpu.memory_space<vmem>>, vector<1x512xf32>
    %16 = vector.broadcast %15 : vector<1x512xf32> to vector<16x512xf32>
    %17 = arith.addf %14, %16 : vector<16x512xf32>
    %cst_11 = arith.constant 0.000000e+00 : f32
    %18 = vector.broadcast %cst_11 : f32 to vector<16x512xf32>
    %19 = arith.maximumf %17, %18 : vector<16x512xf32>
    %c0_12 = arith.constant 0 : index
    %c0_13 = arith.constant 0 : index
    %20 = vector.load %arg6[%c0_12, %c0_13] : memref<512x512xbf16, #tpu.memory_space<vmem>>, vector<512x512xbf16>
    %cst_14 = arith.constant dense<0.000000e+00> : vector<16x512xf32>
    %21 = tpu.matmul %12, %20, %cst_14 {dimension_numbers = #tpu.dot_dimension_numbers<[1], [0], [0], [1], [0, 0, 1, 1], [], []>} : vector<16x512xbf16>, vector<512x512xbf16>, vector<16x512xf32> -> vector<16x512xf32>
    %c0_15 = arith.constant 0 : index
    %c0_16 = arith.constant 0 : index
    %22 = vector.load %arg7[%c0_15, %c0_16] : memref<1x512xf32, #tpu.memory_space<vmem>>, vector<1x512xf32>
    %23 = vector.broadcast %22 : vector<1x512xf32> to vector<16x512xf32>
    %24 = arith.addf %21, %23 : vector<16x512xf32>
    %cst_17 = arith.constant 0.000000e+00 : f32
    %25 = vector.broadcast %cst_17 : f32 to vector<16x512xf32>
    %26 = arith.maximumf %24, %25 : vector<16x512xf32>
    %27 = arith.truncf %19 : vector<16x512xf32> to vector<16x512xbf16>
    %c0_18 = arith.constant 0 : index
    %c0_19 = arith.constant 0 : index
    %28 = vector.load %arg8[%c0_18, %c0_19] : memref<512x1xbf16, #tpu.memory_space<vmem>>, vector<512x1xbf16>
    %cst_20 = arith.constant dense<0.000000e+00> : vector<16x1xf32>
    %29 = tpu.matmul %27, %28, %cst_20 {dimension_numbers = #tpu.dot_dimension_numbers<[1], [0], [0], [1], [0, 0, 1, 1], [], []>} : vector<16x512xbf16>, vector<512x1xbf16>, vector<16x1xf32> -> vector<16x1xf32>
    %c0_21 = arith.constant 0 : index
    %c0_22 = arith.constant 0 : index
    %30 = vector.load %arg9[%c0_21, %c0_22] : memref<1x1xf32, #tpu.memory_space<vmem>>, vector<1x1xf32>
    %31 = vector.broadcast %30 : vector<1x1xf32> to vector<16x1xf32>
    %32 = arith.addf %29, %31 : vector<16x1xf32>
    %33 = arith.truncf %26 : vector<16x512xf32> to vector<16x512xbf16>
    %c0_23 = arith.constant 0 : index
    %c0_24 = arith.constant 0 : index
    %34 = vector.load %arg10[%c0_23, %c0_24] : memref<512x4xbf16, #tpu.memory_space<vmem>>, vector<512x4xbf16>
    %cst_25 = arith.constant dense<0.000000e+00> : vector<16x4xf32>
    %35 = tpu.matmul %33, %34, %cst_25 {dimension_numbers = #tpu.dot_dimension_numbers<[1], [0], [0], [1], [0, 0, 1, 1], [], []>} : vector<16x512xbf16>, vector<512x4xbf16>, vector<16x4xf32> -> vector<16x4xf32>
    %c0_26 = arith.constant 0 : index
    %c0_27 = arith.constant 0 : index
    %36 = vector.load %arg11[%c0_26, %c0_27] : memref<1x4xf32, #tpu.memory_space<vmem>>, vector<1x4xf32>
    %37 = vector.broadcast %36 : vector<1x4xf32> to vector<16x4xf32>
    %38 = arith.addf %35, %37 : vector<16x4xf32>
    %c0_28 = arith.constant 0 : index
    %c0_29 = arith.constant 0 : index
    %39 = vector.load %arg13[%c0_28, %c0_29] : memref<16x4xf32, #tpu.memory_space<vmem>>, vector<16x4xf32>
    tpu.vector_store %arg13[%c0_28, %c0_29], %38 {strides = array<i32>} : memref<16x4xf32, #tpu.memory_space<vmem>>, vector<16x4xf32>,
    %40 = vector.broadcast %32 : vector<16x1xf32> to vector<16x4xf32>
    %41 = arith.addf %40, %38 : vector<16x4xf32>
    %c0_30 = arith.constant 0 : index
    %c0_31 = arith.constant 0 : index
    %42 = vector.load %arg12[%c0_30, %c0_31] : memref<16x4xf32, #tpu.memory_space<vmem>>, vector<16x4xf32>
    tpu.vector_store %arg12[%c0_30, %c0_31], %41 {strides = array<i32>} : memref<16x4xf32, #tpu.memory_space<vmem>>, vector<16x4xf32>,
    return
  }
  func.func @transform_0(%arg0: i32) -> (i32, i32) {
    %c0_i32 = arith.constant 0 : i32
    %c0_i32_0 = arith.constant 0 : i32
    return %arg0, %c0_i32 : i32, i32
  }
  func.func @transform_1(%arg0: i32) -> (i32, i32) {
    %c0_i32 = arith.constant 0 : i32
    %c0_i32_0 = arith.constant 0 : i32
    %c0_i32_1 = arith.constant 0 : i32
    return %c0_i32, %c0_i32_0 : i32, i32
  }
  func.func @transform_2(%arg0: i32) -> (i32, i32) {
    %c0_i32 = arith.constant 0 : i32
    %c0_i32_0 = arith.constant 0 : i32
    %c0_i32_1 = arith.constant 0 : i32
    return %c0_i32, %c0_i32_0 : i32, i32
  }
  func.func @transform_3(%arg0: i32) -> (i32, i32) {
    %c0_i32 = arith.constant 0 : i32
    %c0_i32_0 = arith.constant 0 : i32
    %c0_i32_1 = arith.constant 0 : i32
    return %c0_i32, %c0_i32_0 : i32, i32
  }
  func.func @transform_4(%arg0: i32) -> (i32, i32) {
    %c0_i32 = arith.constant 0 : i32
    %c0_i32_0 = arith.constant 0 : i32
    %c0_i32_1 = arith.constant 0 : i32
    return %c0_i32, %c0_i32_0 : i32, i32
  }
  func.func @transform_5(%arg0: i32) -> (i32, i32) {
    %c0_i32 = arith.constant 0 : i32
    %c0_i32_0 = arith.constant 0 : i32
    %c0_i32_1 = arith.constant 0 : i32
    return %c0_i32, %c0_i32_0 : i32, i32
  }
  func.func @transform_6(%arg0: i32) -> (i32, i32) {
    %c0_i32 = arith.constant 0 : i32
    %c0_i32_0 = arith.constant 0 : i32
    %c0_i32_1 = arith.constant 0 : i32
    return %c0_i32, %c0_i32_0 : i32, i32
  }
  func.func @transform_7(%arg0: i32) -> (i32, i32) {
    %c0_i32 = arith.constant 0 : i32
    %c0_i32_0 = arith.constant 0 : i32
    %c0_i32_1 = arith.constant 0 : i32
    return %c0_i32, %c0_i32_0 : i32, i32
  }
  func.func @transform_8(%arg0: i32) -> (i32, i32) {
    %c0_i32 = arith.constant 0 : i32
    %c0_i32_0 = arith.constant 0 : i32
    %c0_i32_1 = arith.constant 0 : i32
    return %c0_i32, %c0_i32_0 : i32, i32
  }
  func.func @transform_9(%arg0: i32) -> (i32, i32) {
    %c0_i32 = arith.constant 0 : i32
    %c0_i32_0 = arith.constant 0 : i32
    %c0_i32_1 = arith.constant 0 : i32
    return %c0_i32, %c0_i32_0 : i32, i32
  }
  func.func @transform_10(%arg0: i32) -> (i32, i32) {
    %c0_i32 = arith.constant 0 : i32
    %c0_i32_0 = arith.constant 0 : i32
    %c0_i32_1 = arith.constant 0 : i32
    return %c0_i32, %c0_i32_0 : i32, i32
  }
  func.func @transform_11(%arg0: i32) -> (i32, i32) {
    %c0_i32 = arith.constant 0 : i32
    %c0_i32_0 = arith.constant 0 : i32
    return %arg0, %c0_i32 : i32, i32
  }
  func.func @transform_12(%arg0: i32) -> (i32, i32) {
    %c0_i32 = arith.constant 0 : i32
    %c0_i32_0 = arith.constant 0 : i32
    return %arg0, %c0_i32 : i32, i32
  }
}

</mosaic_0001>

<llo_original>
// kernel: tpu_custom_call.1
$region0: #{tpu_custom_call.1}
  #allocation0 [shape = 'u32[]', space=smem, size = 0x4, offset = 0x4, fixed_abs, tag = 'smem constant byte address 0x4 - core index']
  #allocation1 [shape = 'u32[144,128]{1,0:T(1,128)}', space=vmem, size = 0x12000, scoped, tag = 'internal scratch']
  #allocation2 [shape = 'f32[1,1]{1,0:T(1,128)S(1)}', space=vmem, size = 0x200, scoped, tag = 'scoped memory for tpu_custom_call.1']
  %s0 = inlined_call_operand.vmem [shape: f32[32,32], index: 0, kind: input, shape index: {}]
  %s1 = inlined_call_operand.vmem [shape: bf16[32,1024], index: 1, kind: input, shape index: {}]
  %s2 = inlined_call_operand.vmem [shape: f32[1,1024], index: 2, kind: input, shape index: {}]
  %s3 = inlined_call_operand.hbm [shape: bf16[512,512], index: 3, kind: input, shape index: {}]
  %s4 = inlined_call_operand.vmem [shape: f32[1,512], index: 4, kind: input, shape index: {}]
  %s5 = inlined_call_operand.hbm [shape: bf16[512,512], index: 5, kind: input, shape index: {}]
  %s6 = inlined_call_operand.vmem [shape: f32[1,512], index: 6, kind: input, shape index: {}]
  %s7 = inlined_call_operand.vmem [shape: bf16[512,1], index: 7, kind: input, shape index: {}]
  %s8 = inlined_call_operand.<no memory space> [shape: f32[1,1], index: 8, kind: input, shape index: {}]
  %s9 = inlined_call_operand.vmem [shape: bf16[512,4], index: 9, kind: input, shape index: {}]
  %s10 = inlined_call_operand.vmem [shape: f32[1,4], index: 10, kind: input, shape index: {}]
  %s11 = inlined_call_operand.vmem [shape: f32[32,4], index: 11, kind: output, shape index: {0}]
  %s12 = inlined_call_operand.vmem [shape: f32[32,4], index: 12, kind: output, shape index: {1}]
  %13 = xla_tuple %s11, %s12
  %s14 = sld [smem:[#allocation0]]
  $region93: #{tpu_custom_call.1} parent=0
    _
  %s16 = ssub.s32 1, %s14
  %s17 = scalar_select 0, %s16, %s14
  %v18 = vstv %s8
  %19 = vst [vmem:[#allocation2] sm:$0x1] %v18
  $region1: #{tpu_custom_call.1} parent=0
    #allocation3 [shape = 'u8[524288]{0}', space=vmem, size = 0x80000, scoped, tag = 'input window, operand 3, single buffered']
    #allocation4 [shape = 's32[2]{0}', space=sflag, size = 0x8, scoped, tag = 'scoped memory for tpu_custom_call.1']
    #allocation5 [shape = 'u8[524288]{0}', space=vmem, size = 0x80000, scoped, tag = 'input window, operand 5, single buffered']
    #allocation6 [shape = 's32[1]{0}', space=sflag, size = 0x4, scoped, tag = 'scoped memory for tpu_custom_call.1']
    %20 = vsyncpa [#allocation4], 0
    %21 = vsyncpa [#allocation6], 0
    loop: start=0, step=1, limit=4
    $region2: #{tpu_custom_call.1} parent=1 // loop_pre_header
      _
    $region3: #{tpu_custom_call.1} parent=1 // loop_header
      %s23 = sphi 0, %s27
      %p24 = scmp.ge.s32.totalorder %s23, 4
      %s33 = sphi 0, %s35
      %s36 = sphi 0, %s33
      %s37 = sphi 0, %s36
      %s53 = sphi 0, %s37
      %s57 = sphi 0, %s57
      %s59 = sphi 0, %s57
      %s60 = sphi 0, %s59
      %s74 = sphi 0, %s60
      %s78 = sphi 0, %s78
      %s80 = sphi 0, %s78
      %s81 = sphi 0, %s80
      %s95 = sphi 0, %s81
      %s99 = sphi 0, %s99
      %s101 = sphi 0, %s99
      %s102 = sphi 0, %s101
      %s116 = sphi 0, %s102
      %s120 = sphi 0, %s120
      %s122 = sphi 0, %s120
      %s123 = sphi 0, %s122
      %s137 = sphi 0, %s123
      %s141 = sphi 0, %s141
      %s143 = sphi 0, %s141
      %s144 = sphi 0, %s143
      %s158 = sphi 0, %s144
      %s162 = sphi 0, %s162
      %s164 = sphi 0, %s162
      %s165 = sphi 0, %s164
      %s179 = sphi 0, %s165
      %s183 = sphi 0, %s183
      %s185 = sphi 0, %s183
      %s186 = sphi 0, %s185
      %s200 = sphi 0, %s186
      %s204 = sphi 0, %s204
      %s206 = sphi 0, %s204
      %s207 = sphi 0, %s206
      %s221 = sphi 0, %s207
      %s225 = sphi 0, %s225
      %s227 = sphi 0, %s225
      %s228 = sphi 0, %s227
      %s242 = sphi 0, %s228
      %s246 = sphi 0, %s246
      %s248 = sphi 0, %s246
      %s249 = sphi 0, %s248
      %s263 = sphi 0, %s249
      %s269 = sphi 0, %s271
      %s272 = sphi 0, %s269
      %s273 = sphi 0, %s272
      %s289 = sphi 0, %s273
      %s295 = sphi 0, %s297
      %s298 = sphi 0, %s295
      %s299 = sphi 0, %s298
      %s315 = sphi 0, %s299
    $region4: #{tpu_custom_call.1} parent=1 // loop_header_branch
      %26 = sbr.rel (%p24) target = $region8
    $region5: #{tpu_custom_call.1} parent=1 // loop_body
      %s28 = ssub.s32 %s23, 1
      %s29 = ssub.s32 %s23, 2
      %s30 = sadd.s32 %s23, 1
      %s31 = ssub.s32 %s23, %s30
      %p32 = scmp.eq.s32.totalorder %s31, 0
      %s34 = sadd.s32 %s33, 1
      %s35 = scalar_select %p32, %s33, %s34
      %p38 = pneg %p32
      %p39 = scmp.eq.s32.totalorder %s23, 1
      %p40 = por %p38, %p39
      %p41 = scmp.ne.s32.totalorder %s33, %s36
      %p42 = scmp.eq.s32.totalorder %s23, 0
      %p43 = por %p41, %p42
      %p44 = scmp.ne.s32.totalorder %s33, %s36
      %p45 = scmp.eq.s32.totalorder %s28, 1
      %p46 = por %p44, %p45
      %p47 = scmp.ne.s32.totalorder %s36, %s37
      %p48 = scmp.eq.s32.totalorder %s28, 0
      %p49 = por %p47, %p48
      %p50 = scmp.ne.s32.totalorder %s36, %s37
      %p51 = scmp.eq.s32.totalorder %s29, 1
      %p52 = por %p50, %p51
      %p54 = scmp.ne.s32.totalorder %s37, %s53
      %p55 = scmp.eq.s32.totalorder %s29, 0
      %p56 = por %p54, %p55
      %s58 = sadd.s32 %s57, 1
      %p61 = scmp.eq.s32.totalorder %s23, 1
      %p62 = scmp.ne.s32.totalorder %s57, %s59
      %p63 = scmp.eq.s32.totalorder %s23, 0
      %p64 = por %p62, %p63
      %p65 = scmp.ne.s32.totalorder %s57, %s59
      %p66 = scmp.eq.s32.totalorder %s28, 1
      %p67 = por %p65, %p66
      %p68 = scmp.ne.s32.totalorder %s59, %s60
      %p69 = scmp.eq.s32.totalorder %s28, 0
      %p70 = por %p68, %p69
      %p71 = scmp.ne.s32.totalorder %s59, %s60
      %p72 = scmp.eq.s32.totalorder %s29, 1
      %p73 = por %p71, %p72
      %p75 = scmp.ne.s32.totalorder %s60, %s74
      %p76 = scmp.eq.s32.totalorder %s29, 0
      %p77 = por %p75, %p76
      %s79 = sadd.s32 %s78, 1
      %p82 = scmp.eq.s32.totalorder %s23, 1
      %p83 = scmp.ne.s32.totalorder %s78, %s80
      %p84 = scmp.eq.s32.totalorder %s23, 0
      %p85 = por %p83, %p84
      %p86 = scmp.ne.s32.totalorder %s78, %s80
      %p87 = scmp.eq.s32.totalorder %s28, 1
      %p88 = por %p86, %p87
      %p89 = scmp.ne.s32.totalorder %s80, %s81
      %p90 = scmp.eq.s32.totalorder %s28, 0
      %p91 = por %p89, %p90
      %p92 = scmp.ne.s32.totalorder %s80, %s81
      %p93 = scmp.eq.s32.totalorder %s29, 1
      %p94 = por %p92, %p93
      %p96 = scmp.ne.s32.totalorder %s81, %s95
      %p97 = scmp.eq.s32.totalorder %s29, 0
      %p98 = por %p96, %p97
      %s100 = sadd.s32 %s99, 1
      %p103 = scmp.eq.s32.totalorder %s23, 1
      %p104 = scmp.ne.s32.totalorder %s99, %s101
      %p105 = scmp.eq.s32.totalorder %s23, 0
      %p106 = por %p104, %p105
      %p107 = scmp.ne.s32.totalorder %s99, %s101
      %p108 = scmp.eq.s32.totalorder %s28, 1
      %p109 = por %p107, %p108
      %p110 = scmp.ne.s32.totalorder %s101, %s102
      %p111 = scmp.eq.s32.totalorder %s28, 0
      %p112 = por %p110, %p111
      %p113 = scmp.ne.s32.totalorder %s101, %s102
      %p114 = scmp.eq.s32.totalorder %s29, 1
      %p115 = por %p113, %p114
      %p117 = scmp.ne.s32.totalorder %s102, %s116
      %p118 = scmp.eq.s32.totalorder %s29, 0
      %p119 = por %p117, %p118
      %s121 = sadd.s32 %s120, 1
      %p124 = scmp.eq.s32.totalorder %s23, 1
      %p125 = scmp.ne.s32.totalorder %s120, %s122
      %p126 = scmp.eq.s32.totalorder %s23, 0
      %p127 = por %p125, %p126
      %p128 = scmp.ne.s32.totalorder %s120, %s122
      %p129 = scmp.eq.s32.totalorder %s28, 1
      %p130 = por %p128, %p129
      %p131 = scmp.ne.s32.totalorder %s122, %s123
      %p132 = scmp.eq.s32.totalorder %s28, 0
      %p133 = por %p131, %p132
      %p134 = scmp.ne.s32.totalorder %s122, %s123
      %p135 = scmp.eq.s32.totalorder %s29, 1
      %p136 = por %p134, %p135
      %p138 = scmp.ne.s32.totalorder %s123, %s137
      %p139 = scmp.eq.s32.totalorder %s29, 0
      %p140 = por %p138, %p139
      %s142 = sadd.s32 %s141, 1
      %p145 = scmp.eq.s32.totalorder %s23, 1
      %p146 = scmp.ne.s32.totalorder %s141, %s143
      %p147 = scmp.eq.s32.totalorder %s23, 0
      %p148 = por %p146, %p147
      %p149 = scmp.ne.s32.totalorder %s141, %s143
      %p150 = scmp.eq.s32.totalorder %s28, 1
      %p151 = por %p149, %p150
      %p152 = scmp.ne.s32.totalorder %s143, %s144
      %p153 = scmp.eq.s32.totalorder %s28, 0
      %p154 = por %p152, %p153
      %p155 = scmp.ne.s32.totalorder %s143, %s144
      %p156 = scmp.eq.s32.totalorder %s29, 1
      %p157 = por %p155, %p156
      %p159 = scmp.ne.s32.totalorder %s144, %s158
      %p160 = scmp.eq.s32.totalorder %s29, 0
      %p161 = por %p159, %p160
      %s163 = sadd.s32 %s162, 1
      %p166 = scmp.eq.s32.totalorder %s23, 1
      %p167 = scmp.ne.s32.totalorder %s162, %s164
      %p168 = scmp.eq.s32.totalorder %s23, 0
      %p169 = por %p167, %p168
      %p170 = scmp.ne.s32.totalorder %s162, %s164
      %p171 = scmp.eq.s32.totalorder %s28, 1
      %p172 = por %p170, %p171
      %p173 = scmp.ne.s32.totalorder %s164, %s165
      %p174 = scmp.eq.s32.totalorder %s28, 0
      %p175 = por %p173, %p174
      %p176 = scmp.ne.s32.totalorder %s164, %s165
      %p177 = scmp.eq.s32.totalorder %s29, 1
      %p178 = por %p176, %p177
      %p180 = scmp.ne.s32.totalorder %s165, %s179
      %p181 = scmp.eq.s32.totalorder %s29, 0
      %p182 = por %p180, %p181
      %s184 = sadd.s32 %s183, 1
      %p187 = scmp.eq.s32.totalorder %s23, 1
      %p188 = scmp.ne.s32.totalorder %s183, %s185
      %p189 = scmp.eq.s32.totalorder %s23, 0
      %p190 = por %p188, %p189
      %p191 = scmp.ne.s32.totalorder %s183, %s185
      %p192 = scmp.eq.s32.totalorder %s28, 1
      %p193 = por %p191, %p192
      %p194 = scmp.ne.s32.totalorder %s185, %s186
      %p195 = scmp.eq.s32.totalorder %s28, 0
      %p196 = por %p194, %p195
      %p197 = scmp.ne.s32.totalorder %s185, %s186
      %p198 = scmp.eq.s32.totalorder %s29, 1
      %p199 = por %p197, %p198
      %p201 = scmp.ne.s32.totalorder %s186, %s200
      %p202 = scmp.eq.s32.totalorder %s29, 0
      %p203 = por %p201, %p202
      %s205 = sadd.s32 %s204, 1
      %p208 = scmp.eq.s32.totalorder %s23, 1
      %p209 = scmp.ne.s32.totalorder %s204, %s206
      %p210 = scmp.eq.s32.totalorder %s23, 0
      %p211 = por %p209, %p210
      %p212 = scmp.ne.s32.totalorder %s204, %s206
      %p213 = scmp.eq.s32.totalorder %s28, 1
      %p214 = por %p212, %p213
      %p215 = scmp.ne.s32.totalorder %s206, %s207
      %p216 = scmp.eq.s32.totalorder %s28, 0
      %p217 = por %p215, %p216
      %p218 = scmp.ne.s32.totalorder %s206, %s207
      %p219 = scmp.eq.s32.totalorder %s29, 1
      %p220 = por %p218, %p219
      %p222 = scmp.ne.s32.totalorder %s207, %s221
      %p223 = scmp.eq.s32.totalorder %s29, 0
      %p224 = por %p222, %p223
      %s226 = sadd.s32 %s225, 1
      %p229 = scmp.eq.s32.totalorder %s23, 1
      %p230 = scmp.ne.s32.totalorder %s225, %s227
      %p231 = scmp.eq.s32.totalorder %s23, 0
      %p232 = por %p230, %p231
      %p233 = scmp.ne.s32.totalorder %s225, %s227
      %p234 = scmp.eq.s32.totalorder %s28, 1
      %p235 = por %p233, %p234
      %p236 = scmp.ne.s32.totalorder %s227, %s228
      %p237 = scmp.eq.s32.totalorder %s28, 0
      %p238 = por %p236, %p237
      %p239 = scmp.ne.s32.totalorder %s227, %s228
      %p240 = scmp.eq.s32.totalorder %s29, 1
      %p241 = por %p239, %p240
      %p243 = scmp.ne.s32.totalorder %s228, %s242
      %p244 = scmp.eq.s32.totalorder %s29, 0
      %p245 = por %p243, %p244
      %s247 = sadd.s32 %s246, 1
      %p250 = scmp.eq.s32.totalorder %s23, 1
      %p251 = scmp.ne.s32.totalorder %s246, %s248
      %p252 = scmp.eq.s32.totalorder %s23, 0
      %p253 = por %p251, %p252
      %p254 = scmp.ne.s32.totalorder %s246, %s248
      %p255 = scmp.eq.s32.totalorder %s28, 1
      %p256 = por %p254, %p255
      %p257 = scmp.ne.s32.totalorder %s248, %s249
      %p258 = scmp.eq.s32.totalorder %s28, 0
      %p259 = por %p257, %p258
      %p260 = scmp.ne.s32.totalorder %s248, %s249
      %p261 = scmp.eq.s32.totalorder %s29, 1
      %p262 = por %p260, %p261
      %p264 = scmp.ne.s32.totalorder %s249, %s263
      %p265 = scmp.eq.s32.totalorder %s29, 0
      %p266 = por %p264, %p265
      %s267 = ssub.s32 %s23, %s30
      %p268 = scmp.eq.s32.totalorder %s267, 0
      %s270 = sadd.s32 %s269, 1
      %s271 = scalar_select %p268, %s269, %s270
      %p274 = pneg %p268
      %p275 = scmp.eq.s32.totalorder %s23, 1
      %p276 = por %p274, %p275
      %p277 = scmp.ne.s32.totalorder %s269, %s272
      %p278 = scmp.eq.s32.totalorder %s23, 0
      %p279 = por %p277, %p278
      %p280 = scmp.ne.s32.totalorder %s269, %s272
      %p281 = scmp.eq.s32.totalorder %s28, 1
      %p282 = por %p280, %p281
      %p283 = scmp.ne.s32.totalorder %s272, %s273
      %p284 = scmp.eq.s32.totalorder %s28, 0
      %p285 = por %p283, %p284
      %p286 = scmp.ne.s32.totalorder %s272, %s273
      %p287 = scmp.eq.s32.totalorder %s29, 1
      %p288 = por %p286, %p287
      %p290 = scmp.ne.s32.totalorder %s273, %s289
      %p291 = scmp.eq.s32.totalorder %s29, 0
      %p292 = por %p290, %p291
      %s293 = ssub.s32 %s23, %s30
      %p294 = scmp.eq.s32.totalorder %s293, 0
      %s296 = sadd.s32 %s295, 1
      %s297 = scalar_select %p294, %s295, %s296
      %p300 = pneg %p294
      %p301 = scmp.eq.s32.totalorder %s23, 1
      %p302 = por %p300, %p301
      %p303 = scmp.ne.s32.totalorder %s295, %s298
      %p304 = scmp.eq.s32.totalorder %s23, 0
      %p305 = por %p303, %p304
      %p306 = scmp.ne.s32.totalorder %s295, %s298
      %p307 = scmp.eq.s32.totalorder %s28, 1
      %p308 = por %p306, %p307
      %p309 = scmp.ne.s32.totalorder %s298, %s299
      %p310 = scmp.eq.s32.totalorder %s28, 0
      %p311 = por %p309, %p310
      %p312 = scmp.ne.s32.totalorder %s298, %s299
      %p313 = scmp.eq.s32.totalorder %s29, 1
      %p314 = por %p312, %p313
      %p316 = scmp.ne.s32.totalorder %s299, %s315
      %p317 = scmp.eq.s32.totalorder %s29, 0
      %p318 = por %p316, %p317
      %p319 = scmp.le.s32.totalorder 1, %s23
      %p320 = scmp.lt.s32.totalorder %s23, 3
      %p321 = pnand %p319, %p320
      %p322 = pneg %p321
      // Predicated region
      $region9: #{tpu_custom_call.1} parent=5 // pred_check
        _
      $region10: #{tpu_custom_call.1} parent=5 // pred_check_branch
        %324 = sbr.rel (%p321) target = $region12
      $region11: #{tpu_custom_call.1} parent=5 // pred_region
        %s325 = ssub.s32 %s23, 1
        // Predicated region
        $region13: #{tpu_custom_call.1} parent=11 // pred_check
          %p326 = pneg %p70
        $region14: #{tpu_custom_call.1} parent=11 // pred_check_branch
          %328 = sbr.rel (%p326) target = $region16
        $region15: #{tpu_custom_call.1} parent=11 // pred_region
          _
        $region16: #{tpu_custom_call.1} parent=11 // pred_fallthru
          _
        // Predicated region
        $region17: #{tpu_custom_call.1} parent=11 // pred_check
          %p329 = pneg %p91
        $region18: #{tpu_custom_call.1} parent=11 // pred_check_branch
          %331 = sbr.rel (%p329) target = $region20
        $region19: #{tpu_custom_call.1} parent=11 // pred_region
          _
        $region20: #{tpu_custom_call.1} parent=11 // pred_fallthru
          _
        // Predicated region
        $region21: #{tpu_custom_call.1} parent=11 // pred_check
          %p332 = pneg %p112
        $region22: #{tpu_custom_call.1} parent=11 // pred_check_branch
          %334 = sbr.rel (%p332) target = $region24
        $region23: #{tpu_custom_call.1} parent=11 // pred_region
          %s336 = ssub.s32 16384, 16384
          %337 = vsyncadd [#allocation4], %s336
          %s338 = sshll.u32 [#allocation3], 4
          %s339 = int_to_ptr.vmem [resolvable:$true] %s338
          %344 = dma.hbm_to_vmem [thread:$0]  %s3, 16384, %s339, [#allocation4], 256, 256, 16
        $region24: #{tpu_custom_call.1} parent=11 // pred_fallthru
          _
        // Predicated region
        $region25: #{tpu_custom_call.1} parent=11 // pred_check
          %p345 = pneg %p133
        $region26: #{tpu_custom_call.1} parent=11 // pred_check_branch
          %347 = sbr.rel (%p345) target = $region28
        $region27: #{tpu_custom_call.1} parent=11 // pred_region
          _
        $region28: #{tpu_custom_call.1} parent=11 // pred_fallthru
          _
        // Predicated region
        $region29: #{tpu_custom_call.1} parent=11 // pred_check
          %p348 = pneg %p154
        $region30: #{tpu_custom_call.1} parent=11 // pred_check_branch
          %350 = sbr.rel (%p348) target = $region32
        $region31: #{tpu_custom_call.1} parent=11 // pred_region
          %s352 = ssub.s32 16384, 16384
          %353 = vsyncadd [#allocation6], %s352
          %s354 = sshll.u32 [#allocation5], 4
          %s355 = int_to_ptr.vmem [resolvable:$true] %s354
          %360 = dma.hbm_to_vmem [thread:$0]  %s5, 16384, %s355, [#allocation6], 256, 256, 16
        $region32: #{tpu_custom_call.1} parent=11 // pred_fallthru
          _
        // Predicated region
        $region33: #{tpu_custom_call.1} parent=11 // pred_check
          %p361 = pneg %p175
        $region34: #{tpu_custom_call.1} parent=11 // pred_check_branch
          %363 = sbr.rel (%p361) target = $region36
        $region35: #{tpu_custom_call.1} parent=11 // pred_region
          _
        $region36: #{tpu_custom_call.1} parent=11 // pred_fallthru
          _
        // Predicated region
        $region37: #{tpu_custom_call.1} parent=11 // pred_check
          %p364 = pneg %p196
        $region38: #{tpu_custom_call.1} parent=11 // pred_check_branch
          %366 = sbr.rel (%p364) target = $region40
        $region39: #{tpu_custom_call.1} parent=11 // pred_region
          _
        $region40: #{tpu_custom_call.1} parent=11 // pred_fallthru
          _
        // Predicated region
        $region41: #{tpu_custom_call.1} parent=11 // pred_check
          %p367 = pneg %p217
        $region42: #{tpu_custom_call.1} parent=11 // pred_check_branch
          %369 = sbr.rel (%p367) target = $region44
        $region43: #{tpu_custom_call.1} parent=11 // pred_region
          _
        $region44: #{tpu_custom_call.1} parent=11 // pred_fallthru
          _
        // Predicated region
        $region45: #{tpu_custom_call.1} parent=11 // pred_check
          %p370 = pneg %p238
        $region46: #{tpu_custom_call.1} parent=11 // pred_check_branch
          %372 = sbr.rel (%p370) target = $region48
        $region47: #{tpu_custom_call.1} parent=11 // pred_region
          _
        $region48: #{tpu_custom_call.1} parent=11 // pred_fallthru
          _
        // Predicated region
        $region49: #{tpu_custom_call.1} parent=11 // pred_check
          %p373 = pneg %p259
        $region50: #{tpu_custom_call.1} parent=11 // pred_check_branch
          %375 = sbr.rel (%p373) target = $region52
        $region51: #{tpu_custom_call.1} parent=11 // pred_region
          _
        $region52: #{tpu_custom_call.1} parent=11 // pred_fallthru
          _
      $region12: #{tpu_custom_call.1} parent=5 // pred_fallthru
        _
      %p376 = scmp.lt.s32.totalorder %s23, 2
      // Predicated region
      $region53: #{tpu_custom_call.1} parent=5 // pred_check
        %p377 = pneg %p376
      $region54: #{tpu_custom_call.1} parent=5 // pred_check_branch
        %379 = sbr.rel (%p377) target = $region56
      $region55: #{tpu_custom_call.1} parent=5 // pred_region
        // Predicated region
        $region57: #{tpu_custom_call.1} parent=55 // pred_check
          %p380 = pneg %p43
        $region58: #{tpu_custom_call.1} parent=55 // pred_check_branch
          %382 = sbr.rel (%p380) target = $region60
        $region59: #{tpu_custom_call.1} parent=55 // pred_region
          %s383 = smul.u32 2, %s23
          %p384 = scmp.lt.s32.totalorder %s383, 3
          %s385 = scalar_select %p384, %s383, 3
          %s386 = smul.addr %s385, 8
          %s387 = scalar_lea.vmem %s0, %s386
          %s388 = smul.u32 2, %s23
        $region60: #{tpu_custom_call.1} parent=55 // pred_fallthru
          _
      $region56: #{tpu_custom_call.1} parent=5 // pred_fallthru
        _
      %p389 = scmp.le.s32.totalorder 1, %s23
      %p390 = scmp.lt.s32.totalorder %s23, 3
      %p391 = pnand %p389, %p390
      %p392 = pneg %p391
      // Predicated region
      $region61: #{tpu_custom_call.1} parent=5 // pred_check
        _
      $region62: #{tpu_custom_call.1} parent=5 // pred_check_branch
        %394 = sbr.rel (%p391) target = $region64
      $region63: #{tpu_custom_call.1} parent=5 // pred_region
        %s395 = ssub.s32 %s23, 1
        // Predicated region
        $region65: #{tpu_custom_call.1} parent=63 // pred_check
          %p396 = pneg %p112
        $region66: #{tpu_custom_call.1} parent=63 // pred_check_branch
          %398 = sbr.rel (%p396) target = $region68
        $region67: #{tpu_custom_call.1} parent=63 // pred_region
          %399 = dma.done [#allocation4], 16384
        $region68: #{tpu_custom_call.1} parent=63 // pred_fallthru
          _
        // Predicated region
        $region69: #{tpu_custom_call.1} parent=63 // pred_check
          %p400 = pneg %p154
        $region70: #{tpu_custom_call.1} parent=63 // pred_check_branch
          %402 = sbr.rel (%p400) target = $region72
        $region71: #{tpu_custom_call.1} parent=63 // pred_region
          %403 = dma.done [#allocation6], 16384
        $region72: #{tpu_custom_call.1} parent=63 // pred_fallthru
          _
        %s404 = smul.u32 2, %s28
        %p405 = scmp.lt.s32.totalorder %s404, 3
        %s406 = scalar_select %p405, %s404, 3
        %s407 = smul.addr %s406, 8
        %s408 = scalar_lea.vmem %s0, %s407
        %p409 = pneg %p49
        %p410 = pneg %p46
        %p411 = pneg %p70
        %p412 = pneg %p67
        %p413 = pneg %p91
        %p414 = pneg %p88
        %p415 = pneg %p112
        %p416 = pneg %p109
        %p417 = pneg %p133
        %p418 = pneg %p130
        %p419 = pneg %p154
        %p420 = pneg %p151
        %p421 = pneg %p175
        %p422 = pneg %p172
        %p423 = pneg %p196
        %p424 = pneg %p193
        %p425 = pneg %p217
        %p426 = pneg %p214
        %p427 = pneg %p238
        %p428 = pneg %p235
        %p429 = pneg %p259
        %p430 = pneg %p256
        %p431 = pneg %p285
        %p432 = pneg %p282
        %s433 = smul.u32 2, %s28
        %p434 = scmp.lt.s32.totalorder %s433, 3
        %s435 = scalar_select %p434, %s433, 3
        %s436 = smul.addr %s435, 8
        %s437 = scalar_lea.vmem %s11, %s436
        %p438 = pneg %p311
        %p439 = pneg %p308
        %s440 = smul.u32 2, %s28
        %p441 = scmp.lt.s32.totalorder %s440, 3
        %s442 = scalar_select %p441, %s440, 3
        %s443 = smul.addr %s442, 8
        %s444 = scalar_lea.vmem %s12, %s443
        %s445 = smul.u32 2, %s28
        %p446 = scmp.lt.s32.totalorder %s445, 3
        %s447 = scalar_select %p446, %s445, 3
        %s448 = smul.addr %s447, 8
        %s449 = scalar_lea.vmem %s0, %s448
        %s450 = smul.u32 2, %s28
        %s451 = smul.u32 2, %s28
        %p452 = scmp.lt.s32.totalorder %s451, 3
        %s453 = scalar_select %p452, %s451, 3
        %s454 = smul.addr %s453, 8
        %s455 = scalar_lea.vmem %s11, %s454
        %s456 = smul.u32 2, %s28
        %s457 = smul.u32 2, %s28
        %p458 = scmp.lt.s32.totalorder %s457, 3
        %s459 = scalar_select %p458, %s457, 3
        %s460 = smul.addr %s459, 8
        %s461 = scalar_lea.vmem %s12, %s460
        %s462 = smul.u32 2, %s28
        %v464 = vld [vmem:[%s449] sm:$0xff]
        %v465 = vld [vmem:[%s449 + $0x8] sm:$0xff]
        %v466 = vpack.c.bf16 %v465, %v464
        %v467 = vld [vmem:[%s1] sm:$0xff]
        %v468 = vld [vmem:[%s1 + $0x8] sm:$0xff]
        %v469 = vld [vmem:[%s1 + $0x10] sm:$0xff]
        %v470 = vld [vmem:[%s1 + $0x18] sm:$0xff]
        %v471 = vld [vmem:[%s1 + $0x20] sm:$0xff]
        %v472 = vld [vmem:[%s1 + $0x28] sm:$0xff]
        %v473 = vld [vmem:[%s1 + $0x30] sm:$0xff]
        %v474 = vld [vmem:[%s1 + $0x38] sm:$0xff]
        %v475 = vld [vmem:[%s1 + $0x40] sm:$0xff]
        %v476 = vld [vmem:[%s1 + $0x48] sm:$0xff]
        %v477 = vld [vmem:[%s1 + $0x50] sm:$0xff]
        %v478 = vld [vmem:[%s1 + $0x58] sm:$0xff]
        %v479 = vld [vmem:[%s1 + $0x60] sm:$0xff]
        %v480 = vld [vmem:[%s1 + $0x68] sm:$0xff]
        %v481 = vld [vmem:[%s1 + $0x70] sm:$0xff]
        %v482 = vld [vmem:[%s1 + $0x78] sm:$0xff]
        %v483 = vld [vmem:[%s2] sm:$0xff]
        %v485 = vlaneseq
        %v486 = vshrl.u32 %v485, 7
        %v487 = vsub.s32 0, %v486
        %v488 = vrot.slane %v483, %v487
        %v489 = vlaneseq
        %v490 = vshrl.u32 %v489, 7
        %v491 = vsub.s32 1, %v490
        %v492 = vrot.slane %v483, %v491
        %v493 = vlaneseq
        %v494 = vshrl.u32 %v493, 7
        %v495 = vsub.s32 2, %v494
        %v496 = vrot.slane %v483, %v495
        %v497 = vlaneseq
        %v498 = vshrl.u32 %v497, 7
        %v499 = vsub.s32 3, %v498
        %v500 = vrot.slane %v483, %v499
        %v501 = vlaneseq
        %v502 = vshrl.u32 %v501, 7
        %v503 = vsub.s32 4, %v502
        %v504 = vrot.slane %v483, %v503
        %v505 = vlaneseq
        %v506 = vshrl.u32 %v505, 7
        %v507 = vsub.s32 5, %v506
        %v508 = vrot.slane %v483, %v507
        %v509 = vlaneseq
        %v510 = vshrl.u32 %v509, 7
        %v511 = vsub.s32 6, %v510
        %v512 = vrot.slane %v483, %v511
        %v513 = vlaneseq
        %v514 = vshrl.u32 %v513, 7
        %v515 = vsub.s32 7, %v514
        %v516 = vrot.slane %v483, %v515
        %v541 = vunpack.c.l.b16 %v467
        %v542 = vunpack.c.h.b16 %v467
        %v543 = vunpack.c.l.b16 %v468
        %v544 = vunpack.c.h.b16 %v468
        %v545 = vunpack.c.l.b16 %v469
        %v546 = vunpack.c.h.b16 %v469
        %v547 = vunpack.c.l.b16 %v470
        %v548 = vunpack.c.h.b16 %v470
        %v549 = vunpack.c.l.b16 %v471
        %v550 = vunpack.c.h.b16 %v471
        %v551 = vunpack.c.l.b16 %v472
        %v552 = vunpack.c.h.b16 %v472
        %v553 = vunpack.c.l.b16 %v473
        %v554 = vunpack.c.h.b16 %v473
        %v555 = vunpack.c.l.b16 %v474
        %v556 = vunpack.c.h.b16 %v474
        %v557 = vunpack.c.l.b16 %v475
        %v558 = vunpack.c.h.b16 %v475
        %v559 = vunpack.c.l.b16 %v476
        %v560 = vunpack.c.h.b16 %v476
        %v561 = vunpack.c.l.b16 %v477
        %v562 = vunpack.c.h.b16 %v477
        %v563 = vunpack.c.l.b16 %v478
        %v564 = vunpack.c.h.b16 %v478
        %v565 = vunpack.c.l.b16 %v479
        %v566 = vunpack.c.h.b16 %v479
        %v567 = vunpack.c.l.b16 %v480
        %v568 = vunpack.c.h.b16 %v480
        %v569 = vunpack.c.l.b16 %v481
        %v570 = vunpack.c.h.b16 %v481
        %v571 = vunpack.c.l.b16 %v482
        %v572 = vunpack.c.h.b16 %v482
        %v573 = vpack.c.b16 %v549, %v541
        %v574 = vpack.c.b16 %v550, %v542
        %v575 = vpack.c.b16 %v551, %v543
        %v576 = vpack.c.b16 %v552, %v544
        %v577 = vpack.c.b16 %v553, %v545
        %v578 = vpack.c.b16 %v554, %v546
        %v579 = vpack.c.b16 %v555, %v547
        %v580 = vpack.c.b16 %v556, %v548
        %v581 = vpack.c.b16 %v565, %v557
        %v582 = vpack.c.b16 %v566, %v558
        %v583 = vpack.c.b16 %v567, %v559
        %v584 = vpack.c.b16 %v568, %v560
        %v585 = vpack.c.b16 %v569, %v561
        %v586 = vpack.c.b16 %v570, %v562
        %v587 = vpack.c.b16 %v571, %v563
        %v588 = vpack.c.b16 %v572, %v564
        %vm605 = vcmask 261120
        %v607 = vsel %vm605, %v466, 0
        %609 = vmatprep.subr.bf16.mxu0 0
        %610 = vmatpush1.bf16.msra.mxu0 0
        %611 = vmatprep.subr.bf16.mxu0 0
        %612 = vmatpush1.bf16.msra.mxu0 0
        %613 = vmatprep.subr.bf16.mxu0 0
        %614 = vmatpush1.bf16.msra.mxu0 0
        %615 = vmatprep.subr.bf16.mxu0 0
        %616 = vmatpush1.bf16.msra.mxu0 0
        %617 = vmatprep.subr.bf16.mxu0 0
        %618 = vmatpush1.bf16.msra.mxu0 0
        %619 = vmatprep.subr.bf16.mxu0 0
        %620 = vmatpush1.bf16.msra.mxu0 0
        %621 = vmatprep.subr.bf16.mxu0 %v582
        %622 = vmatpush1.bf16.msra.mxu0 %v581
        %623 = vmatprep.subr.bf16.mxu0 %v574
        %624 = vmatpush1.bf16.msra.mxu0 %v573
        %625 = vmatprep.subr.bf16.mxu0 0
        %626 = vmatpush2.bf16.msra.mxu0 0
        %627 = vmatprep.subr.bf16.mxu0 0
        %628 = vmatpush2.bf16.msra.mxu0 0
        %629 = vmatprep.subr.bf16.mxu0 0
        %630 = vmatpush2.bf16.msra.mxu0 0
        %631 = vmatprep.subr.bf16.mxu0 0
        %632 = vmatpush2.bf16.msra.mxu0 0
        %633 = vmatprep.subr.bf16.mxu0 0
        %634 = vmatpush2.bf16.msra.mxu0 0
        %635 = vmatprep.subr.bf16.mxu0 0
        %636 = vmatpush2.bf16.msra.mxu0 0
        %637 = vmatprep.subr.bf16.mxu0 0
        %638 = vmatpush2.bf16.msra.mxu0 0
        %639 = vmatprep.subr.bf16.mxu0 0
        %640 = vmatpush2.bf16.msra.mxu0 0
        %641 = vmatprep.mubr.bf16.mxu0 0
        %642 = vmatmul.mubr.bf16.gmra.mxu0 %v607
        %v643 = vpop.f32.mrf.mxu0
        %v644 = vadd.f32 %v488, %v643
        %v645 = vpop.f32.mrf.mxu0
        %v646 = vadd.f32 %v492, %v645
        %v647 = vpop.f32.mrf.mxu0
        %v648 = vadd.f32 %v488, %v647
        %v649 = vpop.f32.mrf.mxu0
        %v650 = vadd.f32 %v492, %v649
        %651 = vdwg.mxu0
        %652 = vmatprep.subr.bf16.mxu0 0
        %653 = vmatpush1.bf16.msra.mxu0 0
        %654 = vmatprep.subr.bf16.mxu0 0
        %655 = vmatpush1.bf16.msra.mxu0 0
        %656 = vmatprep.subr.bf16.mxu0 0
        %657 = vmatpush1.bf16.msra.mxu0 0
        %658 = vmatprep.subr.bf16.mxu0 0
        %659 = vmatpush1.bf16.msra.mxu0 0
        %660 = vmatprep.subr.bf16.mxu0 0
        %661 = vmatpush1.bf16.msra.mxu0 0
        %662 = vmatprep.subr.bf16.mxu0 0
        %663 = vmatpush1.bf16.msra.mxu0 0
        %664 = vmatprep.subr.bf16.mxu0 %v584
        %665 = vmatpush1.bf16.msra.mxu0 %v583
        %666 = vmatprep.subr.bf16.mxu0 %v576
        %667 = vmatpush1.bf16.msra.mxu0 %v575
        %668 = vmatprep.subr.bf16.mxu0 0
        %669 = vmatpush2.bf16.msra.mxu0 0
        %670 = vmatprep.subr.bf16.mxu0 0
        %671 = vmatpush2.bf16.msra.mxu0 0
        %672 = vmatprep.subr.bf16.mxu0 0
        %673 = vmatpush2.bf16.msra.mxu0 0
        %674 = vmatprep.subr.bf16.mxu0 0
        %675 = vmatpush2.bf16.msra.mxu0 0
        %676 = vmatprep.subr.bf16.mxu0 0
        %677 = vmatpush2.bf16.msra.mxu0 0
        %678 = vmatprep.subr.bf16.mxu0 0
        %679 = vmatpush2.bf16.msra.mxu0 0
        %680 = vmatprep.subr.bf16.mxu0 0
        %681 = vmatpush2.bf16.msra.mxu0 0
        %682 = vmatprep.subr.bf16.mxu0 0
        %683 = vmatpush2.bf16.msra.mxu0 0
        %684 = vmatprep.mubr.bf16.mxu0 0
        %685 = vmatmul.mubr.bf16.gmra.mxu0 %v607
        %v686 = vpop.f32.mrf.mxu0
        %v687 = vadd.f32 %v496, %v686
        %v688 = vpop.f32.mrf.mxu0
        %v689 = vadd.f32 %v500, %v688
        %v690 = vpop.f32.mrf.mxu0
        %v691 = vadd.f32 %v496, %v690
        %v692 = vpop.f32.mrf.mxu0
        %v693 = vadd.f32 %v500, %v692
        %694 = vdwg.mxu0
        %695 = vmatprep.subr.bf16.mxu0 0
        %696 = vmatpush1.bf16.msra.mxu0 0
        %697 = vmatprep.subr.bf16.mxu0 0
        %698 = vmatpush1.bf16.msra.mxu0 0
        %699 = vmatprep.subr.bf16.mxu0 0
        %700 = vmatpush1.bf16.msra.mxu0 0
        %701 = vmatprep.subr.bf16.mxu0 0
        %702 = vmatpush1.bf16.msra.mxu0 0
        %703 = vmatprep.subr.bf16.mxu0 0
        %704 = vmatpush1.bf16.msra.mxu0 0
        %705 = vmatprep.subr.bf16.mxu0 0
        %706 = vmatpush1.bf16.msra.mxu0 0
        %707 = vmatprep.subr.bf16.mxu0 %v586
        %708 = vmatpush1.bf16.msra.mxu0 %v585
        %709 = vmatprep.subr.bf16.mxu0 %v578
        %710 = vmatpush1.bf16.msra.mxu0 %v577
        %711 = vmatprep.subr.bf16.mxu0 0
        %712 = vmatpush2.bf16.msra.mxu0 0
        %713 = vmatprep.subr.bf16.mxu0 0
        %714 = vmatpush2.bf16.msra.mxu0 0
        %715 = vmatprep.subr.bf16.mxu0 0
        %716 = vmatpush2.bf16.msra.mxu0 0
        %717 = vmatprep.subr.bf16.mxu0 0
        %718 = vmatpush2.bf16.msra.mxu0 0
        %719 = vmatprep.subr.bf16.mxu0 0
        %720 = vmatpush2.bf16.msra.mxu0 0
        %721 = vmatprep.subr.bf16.mxu0 0
        %722 = vmatpush2.bf16.msra.mxu0 0
        %723 = vmatprep.subr.bf16.mxu0 0
        %724 = vmatpush2.bf16.msra.mxu0 0
        %725 = vmatprep.subr.bf16.mxu0 0
        %726 = vmatpush2.bf16.msra.mxu0 0
        %727 = vmatprep.mubr.bf16.mxu0 0
        %728 = vmatmul.mubr.bf16.gmra.mxu0 %v607
        %v729 = vpop.f32.mrf.mxu0
        %v730 = vadd.f32 %v504, %v729
        %v731 = vpop.f32.mrf.mxu0
        %v732 = vadd.f32 %v508, %v731
        %v733 = vpop.f32.mrf.mxu0
        %v734 = vadd.f32 %v504, %v733
        %v735 = vpop.f32.mrf.mxu0
        %v736 = vadd.f32 %v508, %v735
        %737 = vdwg.mxu0
        %738 = vmatprep.subr.bf16.mxu0 0
        %739 = vmatpush1.bf16.msra.mxu0 0
        %740 = vmatprep.subr.bf16.mxu0 0
        %741 = vmatpush1.bf16.msra.mxu0 0
        %742 = vmatprep.subr.bf16.mxu0 0
        %743 = vmatpush1.bf16.msra.mxu0 0
        %744 = vmatprep.subr.bf16.mxu0 0
        %745 = vmatpush1.bf16.msra.mxu0 0
        %746 = vmatprep.subr.bf16.mxu0 0
        %747 = vmatpush1.bf16.msra.mxu0 0
        %748 = vmatprep.subr.bf16.mxu0 0
        %749 = vmatpush1.bf16.msra.mxu0 0
        %750 = vmatprep.subr.bf16.mxu0 %v588
        %751 = vmatpush1.bf16.msra.mxu0 %v587
        %752 = vmatprep.subr.bf16.mxu0 %v580
        %753 = vmatpush1.bf16.msra.mxu0 %v579
        %754 = vmatprep.subr.bf16.mxu0 0
        %755 = vmatpush2.bf16.msra.mxu0 0
        %756 = vmatprep.subr.bf16.mxu0 0
        %757 = vmatpush2.bf16.msra.mxu0 0
        %758 = vmatprep.subr.bf16.mxu0 0
        %759 = vmatpush2.bf16.msra.mxu0 0
        %760 = vmatprep.subr.bf16.mxu0 0
        %761 = vmatpush2.bf16.msra.mxu0 0
        %762 = vmatprep.subr.bf16.mxu0 0
        %763 = vmatpush2.bf16.msra.mxu0 0
        %764 = vmatprep.subr.bf16.mxu0 0
        %765 = vmatpush2.bf16.msra.mxu0 0
        %766 = vmatprep.subr.bf16.mxu0 0
        %767 = vmatpush2.bf16.msra.mxu0 0
        %768 = vmatprep.subr.bf16.mxu0 0
        %769 = vmatpush2.bf16.msra.mxu0 0
        %770 = vmatprep.mubr.bf16.mxu0 0
        %771 = vmatmul.mubr.bf16.gmra.mxu0 %v607
        %v772 = vpop.f32.mrf.mxu0
        %v773 = vadd.f32 %v512, %v772
        %v774 = vpop.f32.mrf.mxu0
        %v775 = vadd.f32 %v516, %v774
        %v776 = vpop.f32.mrf.mxu0
        %v777 = vadd.f32 %v512, %v776
        %v778 = vpop.f32.mrf.mxu0
        %v779 = vadd.f32 %v516, %v778
        %780 = vdwg.mxu0
        %v781 = vmax.f32 %v644, 0.0
        %v782 = vmax.f32 %v646, 0.0
        %v783 = vmax.f32 %v687, 0.0
        %v784 = vmax.f32 %v689, 0.0
        %v785 = vmax.f32 %v730, 0.0
        %v786 = vmax.f32 %v732, 0.0
        %v787 = vmax.f32 %v773, 0.0
        %v788 = vmax.f32 %v775, 0.0
        %v789 = vmax.f32 %v648, 0.0
        %v790 = vmax.f32 %v650, 0.0
        %v791 = vmax.f32 %v691, 0.0
        %v792 = vmax.f32 %v693, 0.0
        %v793 = vmax.f32 %v734, 0.0
        %v794 = vmax.f32 %v736, 0.0
        %v795 = vmax.f32 %v777, 0.0
        %v796 = vmax.f32 %v779, 0.0
        %v797 = vpack.c.bf16 %v789, %v781
        %v798 = vpack.c.bf16 %v790, %v782
        %v799 = vpack.c.bf16 %v791, %v783
        %v800 = vpack.c.bf16 %v792, %v784
        %v801 = vpack.c.bf16 %v793, %v785
        %v802 = vpack.c.bf16 %v794, %v786
        %v803 = vpack.c.bf16 %v795, %v787
        %v804 = vpack.c.bf16 %v796, %v788
        %v805 = vld [vmem:[#allocation3] sm:$0xff]
        %v806 = vld [vmem:[#allocation3 + $0x8] sm:$0xff]
        %v807 = vld [vmem:[#allocation3 + $0x10] sm:$0xff]
        %v808 = vld [vmem:[#allocation3 + $0x18] sm:$0xff]
        %v809 = vld [vmem:[#allocation3 + $0x20] sm:$0xff]
        %v810 = vld [vmem:[#allocation3 + $0x28] sm:$0xff]
        %v811 = vld [vmem:[#allocation3 + $0x30] sm:$0xff]
        %v812 = vld [vmem:[#allocation3 + $0x38] sm:$0xff]
        %v813 = vld [vmem:[#allocation3 + $0x40] sm:$0xff]
        %v814 = vld [vmem:[#allocation3 + $0x48] sm:$0xff]
        %v815 = vld [vmem:[#allocation3 + $0x50] sm:$0xff]
        %v816 = vld [vmem:[#allocation3 + $0x58] sm:$0xff]
        %v817 = vld [vmem:[#allocation3 + $0x60] sm:$0xff]
        %v818 = vld [vmem:[#allocation3 + $0x68] sm:$0xff]
        %v819 = vld [vmem:[#allocation3 + $0x70] sm:$0xff]
        %v820 = vld [vmem:[#allocation3 + $0x78] sm:$0xff]
        %v821 = vld [vmem:[#allocation3 + $0x80] sm:$0xff]
        %v822 = vld [vmem:[#allocation3 + $0x88] sm:$0xff]
        %v823 = vld [vmem:[#allocation3 + $0x90] sm:$0xff]
        %v824 = vld [vmem:[#allocation3 + $0x98] sm:$0xff]
        %v825 = vld [vmem:[#allocation3 + $0xa0] sm:$0xff]
        %v826 = vld [vmem:[#allocation3 + $0xa8] sm:$0xff]
        %v827 = vld [vmem:[#allocation3 + $0xb0] sm:$0xff]
        %v828 = vld [vmem:[#allocation3 + $0xb8] sm:$0xff]
        %v829 = vld [vmem:[#allocation3 + $0xc0] sm:$0xff]
        %v830 = vld [vmem:[#allocation3 + $0xc8] sm:$0xff]
        %v831 = vld [vmem:[#allocation3 + $0xd0] sm:$0xff]
        %v832 = vld [vmem:[#allocation3 + $0xd8] sm:$0xff]
        %v833 = vld [vmem:[#allocation3 + $0xe0] sm:$0xff]
        %v834 = vld [vmem:[#allocation3 + $0xe8] sm:$0xff]
        %v835 = vld [vmem:[#allocation3 + $0xf0] sm:$0xff]
        %v836 = vld [vmem:[#allocation3 + $0xf8] sm:$0xff]
        %v837 = vld [vmem:[#allocation3 + $0x100] sm:$0xff]
        %v838 = vld [vmem:[#allocation3 + $0x108] sm:$0xff]
        %v839 = vld [vmem:[#allocation3 + $0x110] sm:$0xff]
        %v840 = vld [vmem:[#allocation3 + $0x118] sm:$0xff]
        %v841 = vld [vmem:[#allocation3 + $0x120] sm:$0xff]
        %v842 = vld [vmem:[#allocation3 + $0x128] sm:$0xff]
        %v843 = vld [vmem:[#allocation3 + $0x130] sm:$0xff]
        %v844 = vld [vmem:[#allocation3 + $0x138] sm:$0xff]
        %v845 = vld [vmem:[#allocation3 + $0x140] sm:$0xff]
        %v846 = vld [vmem:[#allocation3 + $0x148] sm:$0xff]
        %v847 = vld [vmem:[#allocation3 + $0x150] sm:$0xff]
        %v848 = vld [vmem:[#allocation3 + $0x158] sm:$0xff]
        %v849 = vld [vmem:[#allocation3 + $0x160] sm:$0xff]
        %v850 = vld [vmem:[#allocation3 + $0x168] sm:$0xff]
        %v851 = vld [vmem:[#allocation3 + $0x170] sm:$0xff]
        %v852 = vld [vmem:[#allocation3 + $0x178] sm:$0xff]
        %v853 = vld [vmem:[#allocation3 + $0x180] sm:$0xff]
        %v854 = vld [vmem:[#allocation3 + $0x188] sm:$0xff]
        %v855 = vld [vmem:[#allocation3 + $0x190] sm:$0xff]
        %v856 = vld [vmem:[#allocation3 + $0x198] sm:$0xff]
        %v857 = vld [vmem:[#allocation3 + $0x1a0] sm:$0xff]
        %v858 = vld [vmem:[#allocation3 + $0x1a8] sm:$0xff]
        %v859 = vld [vmem:[#allocation3 + $0x1b0] sm:$0xff]
        %v860 = vld [vmem:[#allocation3 + $0x1b8] sm:$0xff]
        %v861 = vld [vmem:[#allocation3 + $0x1c0] sm:$0xff]
        %v862 = vld [vmem:[#allocation3 + $0x1c8] sm:$0xff]
        %v863 = vld [vmem:[#allocation3 + $0x1d0] sm:$0xff]
        %v864 = vld [vmem:[#allocation3 + $0x1d8] sm:$0xff]
        %v865 = vld [vmem:[#allocation3 + $0x1e0] sm:$0xff]
        %v866 = vld [vmem:[#allocation3 + $0x1e8] sm:$0xff]
        %v867 = vld [vmem:[#allocation3 + $0x1f0] sm:$0xff]
        %v868 = vld [vmem:[#allocation3 + $0x1f8] sm:$0xff]
        %v869 = vld [vmem:[#allocation3 + $0x200] sm:$0xff]
        %v870 = vld [vmem:[#allocation3 + $0x208] sm:$0xff]
        %v871 = vld [vmem:[#allocation3 + $0x210] sm:$0xff]
        %v872 = vld [vmem:[#allocation3 + $0x218] sm:$0xff]
        %v873 = vld [vmem:[#allocation3 + $0x220] sm:$0xff]
        %v874 = vld [vmem:[#allocation3 + $0x228] sm:$0xff]
        %v875 = vld [vmem:[#allocation3 + $0x230] sm:$0xff]
        %v876 = vld [vmem:[#allocation3 + $0x238] sm:$0xff]
        %v877 = vld [vmem:[#allocation3 + $0x240] sm:$0xff]
        %v878 = vld [vmem:[#allocation3 + $0x248] sm:$0xff]
        %v879 = vld [vmem:[#allocation3 + $0x250] sm:$0xff]
        %v880 = vld [vmem:[#allocation3 + $0x258] sm:$0xff]
        %v881 = vld [vmem:[#allocation3 + $0x260] sm:$0xff]
        %v882 = vld [vmem:[#allocation3 + $0x268] sm:$0xff]
        %v883 = vld [vmem:[#allocation3 + $0x270] sm:$0xff]
        %v884 = vld [vmem:[#allocation3 + $0x278] sm:$0xff]
        %v885 = vld [vmem:[#allocation3 + $0x280] sm:$0xff]
        %v886 = vld [vmem:[#allocation3 + $0x288] sm:$0xff]
        %v887 = vld [vmem:[#allocation3 + $0x290] sm:$0xff]
        %v888 = vld [vmem:[#allocation3 + $0x298] sm:$0xff]
        %v889 = vld [vmem:[#allocation3 + $0x2a0] sm:$0xff]
        %v890 = vld [vmem:[#allocation3 + $0x2a8] sm:$0xff]
        %v891 = vld [vmem:[#allocation3 + $0x2b0] sm:$0xff]
        %v892 = vld [vmem:[#allocation3 + $0x2b8] sm:$0xff]
        %v893 = vld [vmem:[#allocation3 + $0x2c0] sm:$0xff]
        %v894 = vld [vmem:[#allocation3 + $0x2c8] sm:$0xff]
        %v895 = vld [vmem:[#allocation3 + $0x2d0] sm:$0xff]
        %v896 = vld [vmem:[#allocation3 + $0x2d8] sm:$0xff]
        %v897 = vld [vmem:[#allocation3 + $0x2e0] sm:$0xff]
        %v898 = vld [vmem:[#allocation3 + $0x2e8] sm:$0xff]
        %v899 = vld [vmem:[#allocation3 + $0x2f0] sm:$0xff]
        %v900 = vld [vmem:[#allocation3 + $0x2f8] sm:$0xff]
        %v901 = vld [vmem:[#allocation3 + $0x300] sm:$0xff]
        %v902 = vld [vmem:[#allocation3 + $0x308] sm:$0xff]
        %v903 = vld [vmem:[#allocation3 + $0x310] sm:$0xff]
        %v904 = vld [vmem:[#allocation3 + $0x318] sm:$0xff]
        %v905 = vld [vmem:[#allocation3 + $0x320] sm:$0xff]
        %v906 = vld [vmem:[#allocation3 + $0x328] sm:$0xff]
        %v907 = vld [vmem:[#allocation3 + $0x330] sm:$0xff]
        %v908 = vld [vmem:[#allocation3 + $0x338] sm:$0xff]
        %v909 = vld [vmem:[#allocation3 + $0x340] sm:$0xff]
        %v910 = vld [vmem:[#allocation3 + $0x348] sm:$0xff]
        %v911 = vld [vmem:[#allocation3 + $0x350] sm:$0xff]
        %v912 = vld [vmem:[#allocation3 + $0x358] sm:$0xff]
        %v913 = vld [vmem:[#allocation3 + $0x360] sm:$0xff]
        %v914 = vld [vmem:[#allocation3 + $0x368] sm:$0xff]
        %v915 = vld [vmem:[#allocation3 + $0x370] sm:$0xff]
        %v916 = vld [vmem:[#allocation3 + $0x378] sm:$0xff]
        %v917 = vld [vmem:[#allocation3 + $0x380] sm:$0xff]
        %v918 = vld [vmem:[#allocation3 + $0x388] sm:$0xff]
        %v919 = vld [vmem:[#allocation3 + $0x390] sm:$0xff]
        %v920 = vld [vmem:[#allocation3 + $0x398] sm:$0xff]
        %v921 = vld [vmem:[#allocation3 + $0x3a0] sm:$0xff]
        %v922 = vld [vmem:[#allocation3 + $0x3a8] sm:$0xff]
        %v923 = vld [vmem:[#allocation3 + $0x3b0] sm:$0xff]
        %v924 = vld [vmem:[#allocation3 + $0x3b8] sm:$0xff]
        %v925 = vld [vmem:[#allocation3 + $0x3c0] sm:$0xff]
        %v926 = vld [vmem:[#allocation3 + $0x3c8] sm:$0xff]
        %v927 = vld [vmem:[#allocation3 + $0x3d0] sm:$0xff]
        %v928 = vld [vmem:[#allocation3 + $0x3d8] sm:$0xff]
        %v929 = vld [vmem:[#allocation3 + $0x3e0] sm:$0xff]
        %v930 = vld [vmem:[#allocation3 + $0x3e8] sm:$0xff]
        %v931 = vld [vmem:[#allocation3 + $0x3f0] sm:$0xff]
        %v932 = vld [vmem:[#allocation3 + $0x3f8] sm:$0xff]
        %v933 = vld [vmem:[%s4] sm:$0xf]
        %v935 = vlaneseq
        %v936 = vshrl.u32 %v935, 7
        %v937 = vsub.s32 0, %v936
        %v938 = vrot.slane %v933, %v937
        %v939 = vlaneseq
        %v940 = vshrl.u32 %v939, 7
        %v941 = vsub.s32 1, %v940
        %v942 = vrot.slane %v933, %v941
        %v943 = vlaneseq
        %v944 = vshrl.u32 %v943, 7
        %v945 = vsub.s32 2, %v944
        %v946 = vrot.slane %v933, %v945
        %v947 = vlaneseq
        %v948 = vshrl.u32 %v947, 7
        %v949 = vsub.s32 3, %v948
        %v950 = vrot.slane %v933, %v949
        %v1083 = vunpack.c.l.b16 %v805
        %v1084 = vunpack.c.h.b16 %v805
        %v1085 = vunpack.c.l.b16 %v806
        %v1086 = vunpack.c.h.b16 %v806
        %v1087 = vunpack.c.l.b16 %v807
        %v1088 = vunpack.c.h.b16 %v807
        %v1089 = vunpack.c.l.b16 %v808
        %v1090 = vunpack.c.h.b16 %v808
        %v1091 = vunpack.c.l.b16 %v809
        %v1092 = vunpack.c.h.b16 %v809
        %v1093 = vunpack.c.l.b16 %v810
        %v1094 = vunpack.c.h.b16 %v810
        %v1095 = vunpack.c.l.b16 %v811
        %v1096 = vunpack.c.h.b16 %v811
        %v1097 = vunpack.c.l.b16 %v812
        %v1098 = vunpack.c.h.b16 %v812
        %v1099 = vunpack.c.l.b16 %v813
        %v1100 = vunpack.c.h.b16 %v813
        %v1101 = vunpack.c.l.b16 %v814
        %v1102 = vunpack.c.h.b16 %v814
        %v1103 = vunpack.c.l.b16 %v815
        %v1104 = vunpack.c.h.b16 %v815
        %v1105 = vunpack.c.l.b16 %v816
        %v1106 = vunpack.c.h.b16 %v816
        %v1107 = vunpack.c.l.b16 %v817
        %v1108 = vunpack.c.h.b16 %v817
        %v1109 = vunpack.c.l.b16 %v818
        %v1110 = vunpack.c.h.b16 %v818
        %v1111 = vunpack.c.l.b16 %v819
        %v1112 = vunpack.c.h.b16 %v819
        %v1113 = vunpack.c.l.b16 %v820
        %v1114 = vunpack.c.h.b16 %v820
        %v1115 = vunpack.c.l.b16 %v821
        %v1116 = vunpack.c.h.b16 %v821
        %v1117 = vunpack.c.l.b16 %v822
        %v1118 = vunpack.c.h.b16 %v822
        %v1119 = vunpack.c.l.b16 %v823
        %v1120 = vunpack.c.h.b16 %v823
        %v1121 = vunpack.c.l.b16 %v824
        %v1122 = vunpack.c.h.b16 %v824
        %v1123 = vunpack.c.l.b16 %v825
        %v1124 = vunpack.c.h.b16 %v825
        %v1125 = vunpack.c.l.b16 %v826
        %v1126 = vunpack.c.h.b16 %v826
        %v1127 = vunpack.c.l.b16 %v827
        %v1128 = vunpack.c.h.b16 %v827
        %v1129 = vunpack.c.l.b16 %v828
        %v1130 = vunpack.c.h.b16 %v828
        %v1131 = vunpack.c.l.b16 %v829
        %v1132 = vunpack.c.h.b16 %v829
        %v1133 = vunpack.c.l.b16 %v830
        %v1134 = vunpack.c.h.b16 %v830
        %v1135 = vunpack.c.l.b16 %v831
        %v1136 = vunpack.c.h.b16 %v831
        %v1137 = vunpack.c.l.b16 %v832
        %v1138 = vunpack.c.h.b16 %v832
        %v1139 = vunpack.c.l.b16 %v833
        %v1140 = vunpack.c.h.b16 %v833
        %v1141 = vunpack.c.l.b16 %v834
        %v1142 = vunpack.c.h.b16 %v834
        %v1143 = vunpack.c.l.b16 %v835
        %v1144 = vunpack.c.h.b16 %v835
        %v1145 = vunpack.c.l.b16 %v836
        %v1146 = vunpack.c.h.b16 %v836
        %v1147 = vunpack.c.l.b16 %v837
        %v1148 = vunpack.c.h.b16 %v837
        %v1149 = vunpack.c.l.b16 %v838
        %v1150 = vunpack.c.h.b16 %v838
        %v1151 = vunpack.c.l.b16 %v839
        %v1152 = vunpack.c.h.b16 %v839
        %v1153 = vunpack.c.l.b16 %v840
        %v1154 = vunpack.c.h.b16 %v840
        %v1155 = vunpack.c.l.b16 %v841
        %v1156 = vunpack.c.h.b16 %v841
        %v1157 = vunpack.c.l.b16 %v842
        %v1158 = vunpack.c.h.b16 %v842
        %v1159 = vunpack.c.l.b16 %v843
        %v1160 = vunpack.c.h.b16 %v843
        %v1161 = vunpack.c.l.b16 %v844
        %v1162 = vunpack.c.h.b16 %v844
        %v1163 = vunpack.c.l.b16 %v845
        %v1164 = vunpack.c.h.b16 %v845
        %v1165 = vunpack.c.l.b16 %v846
        %v1166 = vunpack.c.h.b16 %v846
        %v1167 = vunpack.c.l.b16 %v847
        %v1168 = vunpack.c.h.b16 %v847
        %v1169 = vunpack.c.l.b16 %v848
        %v1170 = vunpack.c.h.b16 %v848
        %v1171 = vunpack.c.l.b16 %v849
        %v1172 = vunpack.c.h.b16 %v849
        %v1173 = vunpack.c.l.b16 %v850
        %v1174 = vunpack.c.h.b16 %v850
        %v1175 = vunpack.c.l.b16 %v851
        %v1176 = vunpack.c.h.b16 %v851
        %v1177 = vunpack.c.l.b16 %v852
        %v1178 = vunpack.c.h.b16 %v852
        %v1179 = vunpack.c.l.b16 %v853
        %v1180 = vunpack.c.h.b16 %v853
        %v1181 = vunpack.c.l.b16 %v854
        %v1182 = vunpack.c.h.b16 %v854
        %v1183 = vunpack.c.l.b16 %v855
        %v1184 = vunpack.c.h.b16 %v855
        %v1185 = vunpack.c.l.b16 %v856
        %v1186 = vunpack.c.h.b16 %v856
        %v1187 = vunpack.c.l.b16 %v857
        %v1188 = vunpack.c.h.b16 %v857
        %v1189 = vunpack.c.l.b16 %v858
        %v1190 = vunpack.c.h.b16 %v858
        %v1191 = vunpack.c.l.b16 %v859
        %v1192 = vunpack.c.h.b16 %v859
        %v1193 = vunpack.c.l.b16 %v860
        %v1194 = vunpack.c.h.b16 %v860
        %v1195 = vunpack.c.l.b16 %v861
        %v1196 = vunpack.c.h.b16 %v861
        %v1197 = vunpack.c.l.b16 %v862
        %v1198 = vunpack.c.h.b16 %v862
        %v1199 = vunpack.c.l.b16 %v863
        %v1200 = vunpack.c.h.b16 %v863
        %v1201 = vunpack.c.l.b16 %v864
        %v1202 = vunpack.c.h.b16 %v864
        %v1203 = vunpack.c.l.b16 %v865
        %v1204 = vunpack.c.h.b16 %v865
        %v1205 = vunpack.c.l.b16 %v866
        %v1206 = vunpack.c.h.b16 %v866
        %v1207 = vunpack.c.l.b16 %v867
        %v1208 = vunpack.c.h.b16 %v867
        %v1209 = vunpack.c.l.b16 %v868
        %v1210 = vunpack.c.h.b16 %v868
        %v1211 = vunpack.c.l.b16 %v869
        %v1212 = vunpack.c.h.b16 %v869
        %v1213 = vunpack.c.l.b16 %v870
        %v1214 = vunpack.c.h.b16 %v870
        %v1215 = vunpack.c.l.b16 %v871
        %v1216 = vunpack.c.h.b16 %v871
        %v1217 = vunpack.c.l.b16 %v872
        %v1218 = vunpack.c.h.b16 %v872
        %v1219 = vunpack.c.l.b16 %v873
        %v1220 = vunpack.c.h.b16 %v873
        %v1221 = vunpack.c.l.b16 %v874
        %v1222 = vunpack.c.h.b16 %v874
        %v1223 = vunpack.c.l.b16 %v875
        %v1224 = vunpack.c.h.b16 %v875
        %v1225 = vunpack.c.l.b16 %v876
        %v1226 = vunpack.c.h.b16 %v876
        %v1227 = vunpack.c.l.b16 %v877
        %v1228 = vunpack.c.h.b16 %v877
        %v1229 = vunpack.c.l.b16 %v878
        %v1230 = vunpack.c.h.b16 %v878
        %v1231 = vunpack.c.l.b16 %v879
        %v1232 = vunpack.c.h.b16 %v879
        %v1233 = vunpack.c.l.b16 %v880
        %v1234 = vunpack.c.h.b16 %v880
        %v1235 = vunpack.c.l.b16 %v881
        %v1236 = vunpack.c.h.b16 %v881
        %v1237 = vunpack.c.l.b16 %v882
        %v1238 = vunpack.c.h.b16 %v882
        %v1239 = vunpack.c.l.b16 %v883
        %v1240 = vunpack.c.h.b16 %v883
        %v1241 = vunpack.c.l.b16 %v884
        %v1242 = vunpack.c.h.b16 %v884
        %v1243 = vunpack.c.l.b16 %v885
        %v1244 = vunpack.c.h.b16 %v885
        %v1245 = vunpack.c.l.b16 %v886
        %v1246 = vunpack.c.h.b16 %v886
        %v1247 = vunpack.c.l.b16 %v887
        %v1248 = vunpack.c.h.b16 %v887
        %v1249 = vunpack.c.l.b16 %v888
        %v1250 = vunpack.c.h.b16 %v888
        %v1251 = vunpack.c.l.b16 %v889
        %v1252 = vunpack.c.h.b16 %v889
        %v1253 = vunpack.c.l.b16 %v890
        %v1254 = vunpack.c.h.b16 %v890
        %v1255 = vunpack.c.l.b16 %v891
        %v1256 = vunpack.c.h.b16 %v891
        %v1257 = vunpack.c.l.b16 %v892
        %v1258 = vunpack.c.h.b16 %v892
        %v1259 = vunpack.c.l.b16 %v893
        %v1260 = vunpack.c.h.b16 %v893
        %v1261 = vunpack.c.l.b16 %v894
        %v1262 = vunpack.c.h.b16 %v894
        %v1263 = vunpack.c.l.b16 %v895
        %v1264 = vunpack.c.h.b16 %v895
        %v1265 = vunpack.c.l.b16 %v896
        %v1266 = vunpack.c.h.b16 %v896
        %v1267 = vunpack.c.l.b16 %v897
        %v1268 = vunpack.c.h.b16 %v897
        %v1269 = vunpack.c.l.b16 %v898
        %v1270 = vunpack.c.h.b16 %v898
        %v1271 = vunpack.c.l.b16 %v899
        %v1272 = vunpack.c.h.b16 %v899
        %v1273 = vunpack.c.l.b16 %v900
        %v1274 = vunpack.c.h.b16 %v900
        %v1275 = vunpack.c.l.b16 %v901
        %v1276 = vunpack.c.h.b16 %v901
        %v1277 = vunpack.c.l.b16 %v902
        %v1278 = vunpack.c.h.b16 %v902
        %v1279 = vunpack.c.l.b16 %v903
        %v1280 = vunpack.c.h.b16 %v903
        %v1281 = vunpack.c.l.b16 %v904
        %v1282 = vunpack.c.h.b16 %v904
        %v1283 = vunpack.c.l.b16 %v905
        %v1284 = vunpack.c.h.b16 %v905
        %v1285 = vunpack.c.l.b16 %v906
        %v1286 = vunpack.c.h.b16 %v906
        %v1287 = vunpack.c.l.b16 %v907
        %v1288 = vunpack.c.h.b16 %v907
        %v1289 = vunpack.c.l.b16 %v908
        %v1290 = vunpack.c.h.b16 %v908
        %v1291 = vunpack.c.l.b16 %v909
        %v1292 = vunpack.c.h.b16 %v909
        %v1293 = vunpack.c.l.b16 %v910
        %v1294 = vunpack.c.h.b16 %v910
        %v1295 = vunpack.c.l.b16 %v911
        %v1296 = vunpack.c.h.b16 %v911
        %v1297 = vunpack.c.l.b16 %v912
        %v1298 = vunpack.c.h.b16 %v912
        %v1299 = vunpack.c.l.b16 %v913
        %v1300 = vunpack.c.h.b16 %v913
        %v1301 = vunpack.c.l.b16 %v914
        %v1302 = vunpack.c.h.b16 %v914
        %v1303 = vunpack.c.l.b16 %v915
        %v1304 = vunpack.c.h.b16 %v915
        %v1305 = vunpack.c.l.b16 %v916
        %v1306 = vunpack.c.h.b16 %v916
        %v1307 = vunpack.c.l.b16 %v917
        %v1308 = vunpack.c.h.b16 %v917
        %v1309 = vunpack.c.l.b16 %v918
        %v1310 = vunpack.c.h.b16 %v918
        %v1311 = vunpack.c.l.b16 %v919
        %v1312 = vunpack.c.h.b16 %v919
        %v1313 = vunpack.c.l.b16 %v920
        %v1314 = vunpack.c.h.b16 %v920
        %v1315 = vunpack.c.l.b16 %v921
        %v1316 = vunpack.c.h.b16 %v921
        %v1317 = vunpack.c.l.b16 %v922
        %v1318 = vunpack.c.h.b16 %v922
        %v1319 = vunpack.c.l.b16 %v923
        %v1320 = vunpack.c.h.b16 %v923
        %v1321 = vunpack.c.l.b16 %v924
        %v1322 = vunpack.c.h.b16 %v924
        %v1323 = vunpack.c.l.b16 %v925
        %v1324 = vunpack.c.h.b16 %v925
        %v1325 = vunpack.c.l.b16 %v926
        %v1326 = vunpack.c.h.b16 %v926
        %v1327 = vunpack.c.l.b16 %v927
        %v1328 = vunpack.c.h.b16 %v927
        %v1329 = vunpack.c.l.b16 %v928
        %v1330 = vunpack.c.h.b16 %v928
        %v1331 = vunpack.c.l.b16 %v929
        %v1332 = vunpack.c.h.b16 %v929
        %v1333 = vunpack.c.l.b16 %v930
        %v1334 = vunpack.c.h.b16 %v930
        %v1335 = vunpack.c.l.b16 %v931
        %v1336 = vunpack.c.h.b16 %v931
        %v1337 = vunpack.c.l.b16 %v932
        %v1338 = vunpack.c.h.b16 %v932
        %v1339 = vpack.c.b16 %v1087, %v1083
        %v1340 = vpack.c.b16 %v1088, %v1084
        %v1341 = vpack.c.b16 %v1089, %v1085
        %v1342 = vpack.c.b16 %v1090, %v1086
        %v1343 = vpack.c.b16 %v1095, %v1091
        %v1344 = vpack.c.b16 %v1096, %v1092
        %v1345 = vpack.c.b16 %v1097, %v1093
        %v1346 = vpack.c.b16 %v1098, %v1094
        %v1347 = vpack.c.b16 %v1103, %v1099
        %v1348 = vpack.c.b16 %v1104, %v1100
        %v1349 = vpack.c.b16 %v1105, %v1101
        %v1350 = vpack.c.b16 %v1106, %v1102
        %v1351 = vpack.c.b16 %v1111, %v1107
        %v1352 = vpack.c.b16 %v1112, %v1108
        %v1353 = vpack.c.b16 %v1113, %v1109
        %v1354 = vpack.c.b16 %v1114, %v1110
        %v1355 = vpack.c.b16 %v1119, %v1115
        %v1356 = vpack.c.b16 %v1120, %v1116
        %v1357 = vpack.c.b16 %v1121, %v1117
        %v1358 = vpack.c.b16 %v1122, %v1118
        %v1359 = vpack.c.b16 %v1127, %v1123
        %v1360 = vpack.c.b16 %v1128, %v1124
        %v1361 = vpack.c.b16 %v1129, %v1125
        %v1362 = vpack.c.b16 %v1130, %v1126
        %v1363 = vpack.c.b16 %v1135, %v1131
        %v1364 = vpack.c.b16 %v1136, %v1132
        %v1365 = vpack.c.b16 %v1137, %v1133
        %v1366 = vpack.c.b16 %v1138, %v1134
        %v1367 = vpack.c.b16 %v1143, %v1139
        %v1368 = vpack.c.b16 %v1144, %v1140
        %v1369 = vpack.c.b16 %v1145, %v1141
        %v1370 = vpack.c.b16 %v1146, %v1142
        %v1371 = vpack.c.b16 %v1151, %v1147
        %v1372 = vpack.c.b16 %v1152, %v1148
        %v1373 = vpack.c.b16 %v1153, %v1149
        %v1374 = vpack.c.b16 %v1154, %v1150
        %v1375 = vpack.c.b16 %v1159, %v1155
        %v1376 = vpack.c.b16 %v1160, %v1156
        %v1377 = vpack.c.b16 %v1161, %v1157
        %v1378 = vpack.c.b16 %v1162, %v1158
        %v1379 = vpack.c.b16 %v1167, %v1163
        %v1380 = vpack.c.b16 %v1168, %v1164
        %v1381 = vpack.c.b16 %v1169, %v1165
        %v1382 = vpack.c.b16 %v1170, %v1166
        %v1383 = vpack.c.b16 %v1175, %v1171
        %v1384 = vpack.c.b16 %v1176, %v1172
        %v1385 = vpack.c.b16 %v1177, %v1173
        %v1386 = vpack.c.b16 %v1178, %v1174
        %v1387 = vpack.c.b16 %v1183, %v1179
        %v1388 = vpack.c.b16 %v1184, %v1180
        %v1389 = vpack.c.b16 %v1185, %v1181
        %v1390 = vpack.c.b16 %v1186, %v1182
        %v1391 = vpack.c.b16 %v1191, %v1187
        %v1392 = vpack.c.b16 %v1192, %v1188
        %v1393 = vpack.c.b16 %v1193, %v1189
        %v1394 = vpack.c.b16 %v1194, %v1190
        %v1395 = vpack.c.b16 %v1199, %v1195
        %v1396 = vpack.c.b16 %v1200, %v1196
        %v1397 = vpack.c.b16 %v1201, %v1197
        %v1398 = vpack.c.b16 %v1202, %v1198
        %v1399 = vpack.c.b16 %v1207, %v1203
        %v1400 = vpack.c.b16 %v1208, %v1204
        %v1401 = vpack.c.b16 %v1209, %v1205
        %v1402 = vpack.c.b16 %v1210, %v1206
        %v1403 = vpack.c.b16 %v1215, %v1211
        %v1404 = vpack.c.b16 %v1216, %v1212
        %v1405 = vpack.c.b16 %v1217, %v1213
        %v1406 = vpack.c.b16 %v1218, %v1214
        %v1407 = vpack.c.b16 %v1223, %v1219
        %v1408 = vpack.c.b16 %v1224, %v1220
        %v1409 = vpack.c.b16 %v1225, %v1221
        %v1410 = vpack.c.b16 %v1226, %v1222
        %v1411 = vpack.c.b16 %v1231, %v1227
        %v1412 = vpack.c.b16 %v1232, %v1228
        %v1413 = vpack.c.b16 %v1233, %v1229
        %v1414 = vpack.c.b16 %v1234, %v1230
        %v1415 = vpack.c.b16 %v1239, %v1235
        %v1416 = vpack.c.b16 %v1240, %v1236
        %v1417 = vpack.c.b16 %v1241, %v1237
        %v1418 = vpack.c.b16 %v1242, %v1238
        %v1419 = vpack.c.b16 %v1247, %v1243
        %v1420 = vpack.c.b16 %v1248, %v1244
        %v1421 = vpack.c.b16 %v1249, %v1245
        %v1422 = vpack.c.b16 %v1250, %v1246
        %v1423 = vpack.c.b16 %v1255, %v1251
        %v1424 = vpack.c.b16 %v1256, %v1252
        %v1425 = vpack.c.b16 %v1257, %v1253
        %v1426 = vpack.c.b16 %v1258, %v1254
        %v1427 = vpack.c.b16 %v1263, %v1259
        %v1428 = vpack.c.b16 %v1264, %v1260
        %v1429 = vpack.c.b16 %v1265, %v1261
        %v1430 = vpack.c.b16 %v1266, %v1262
        %v1431 = vpack.c.b16 %v1271, %v1267
        %v1432 = vpack.c.b16 %v1272, %v1268
        %v1433 = vpack.c.b16 %v1273, %v1269
        %v1434 = vpack.c.b16 %v1274, %v1270
        %v1435 = vpack.c.b16 %v1279, %v1275
        %v1436 = vpack.c.b16 %v1280, %v1276
        %v1437 = vpack.c.b16 %v1281, %v1277
        %v1438 = vpack.c.b16 %v1282, %v1278
        %v1439 = vpack.c.b16 %v1287, %v1283
        %v1440 = vpack.c.b16 %v1288, %v1284
        %v1441 = vpack.c.b16 %v1289, %v1285
        %v1442 = vpack.c.b16 %v1290, %v1286
        %v1443 = vpack.c.b16 %v1295, %v1291
        %v1444 = vpack.c.b16 %v1296, %v1292
        %v1445 = vpack.c.b16 %v1297, %v1293
        %v1446 = vpack.c.b16 %v1298, %v1294
        %v1447 = vpack.c.b16 %v1303, %v1299
        %v1448 = vpack.c.b16 %v1304, %v1300
        %v1449 = vpack.c.b16 %v1305, %v1301
        %v1450 = vpack.c.b16 %v1306, %v1302
        %v1451 = vpack.c.b16 %v1311, %v1307
        %v1452 = vpack.c.b16 %v1312, %v1308
        %v1453 = vpack.c.b16 %v1313, %v1309
        %v1454 = vpack.c.b16 %v1314, %v1310
        %v1455 = vpack.c.b16 %v1319, %v1315
        %v1456 = vpack.c.b16 %v1320, %v1316
        %v1457 = vpack.c.b16 %v1321, %v1317
        %v1458 = vpack.c.b16 %v1322, %v1318
        %v1459 = vpack.c.b16 %v1327, %v1323
        %v1460 = vpack.c.b16 %v1328, %v1324
        %v1461 = vpack.c.b16 %v1329, %v1325
        %v1462 = vpack.c.b16 %v1330, %v1326
        %v1463 = vpack.c.b16 %v1335, %v1331
        %v1464 = vpack.c.b16 %v1336, %v1332
        %v1465 = vpack.c.b16 %v1337, %v1333
        %v1466 = vpack.c.b16 %v1338, %v1334
        %1595 = vmatprep.subr.bf16.mxu0 %v1368
        %1596 = vmatpush1.bf16.msra.mxu0 %v1367
        %1597 = vmatprep.subr.bf16.mxu0 %v1364
        %1598 = vmatpush1.bf16.msra.mxu0 %v1363
        %1599 = vmatprep.subr.bf16.mxu0 %v1360
        %1600 = vmatpush1.bf16.msra.mxu0 %v1359
        %1601 = vmatprep.subr.bf16.mxu0 %v1356
        %1602 = vmatpush1.bf16.msra.mxu0 %v1355
        %1603 = vmatprep.subr.bf16.mxu0 %v1352
        %1604 = vmatpush1.bf16.msra.mxu0 %v1351
        %1605 = vmatprep.subr.bf16.mxu0 %v1348
        %1606 = vmatpush1.bf16.msra.mxu0 %v1347
        %1607 = vmatprep.subr.bf16.mxu0 %v1344
        %1608 = vmatpush1.bf16.msra.mxu0 %v1343
        %1609 = vmatprep.subr.bf16.mxu0 %v1340
        %1610 = vmatpush1.bf16.msra.mxu0 %v1339
        %1611 = vmatprep.subr.bf16.mxu0 %v1400
        %1612 = vmatpush2.bf16.msra.mxu0 %v1399
        %1613 = vmatprep.subr.bf16.mxu0 %v1396
        %1614 = vmatpush2.bf16.msra.mxu0 %v1395
        %1615 = vmatprep.subr.bf16.mxu0 %v1392
        %1616 = vmatpush2.bf16.msra.mxu0 %v1391
        %1617 = vmatprep.subr.bf16.mxu0 %v1388
        %1618 = vmatpush2.bf16.msra.mxu0 %v1387
        %1619 = vmatprep.subr.bf16.mxu0 %v1384
        %1620 = vmatpush2.bf16.msra.mxu0 %v1383
        %1621 = vmatprep.subr.bf16.mxu0 %v1380
        %1622 = vmatpush2.bf16.msra.mxu0 %v1379
        %1623 = vmatprep.subr.bf16.mxu0 %v1376
        %1624 = vmatpush2.bf16.msra.mxu0 %v1375
        %1625 = vmatprep.subr.bf16.mxu0 %v1372
        %1626 = vmatpush2.bf16.msra.mxu0 %v1371
        %1627 = vmatprep.mubr.bf16.mxu0 %v798
        %1628 = vmatmul.mubr.bf16.gmra.mxu0 %v797
        %v1629 = vpop.f32.mrf.mxu0
        %v1630 = vadd.f32 %v938, %v1629
        %v1631 = vpop.f32.mrf.mxu0
        %v1632 = vadd.f32 %v942, %v1631
        %v1633 = vpop.f32.mrf.mxu0
        %v1634 = vadd.f32 %v938, %v1633
        %v1635 = vpop.f32.mrf.mxu0
        %v1636 = vadd.f32 %v942, %v1635
        %1637 = vdwg.mxu0
        %1638 = vmatprep.subr.bf16.mxu0 %v1432
        %1639 = vmatpush1.bf16.msra.mxu0 %v1431
        %1640 = vmatprep.subr.bf16.mxu0 %v1428
        %1641 = vmatpush1.bf16.msra.mxu0 %v1427
        %1642 = vmatprep.subr.bf16.mxu0 %v1424
        %1643 = vmatpush1.bf16.msra.mxu0 %v1423
        %1644 = vmatprep.subr.bf16.mxu0 %v1420
        %1645 = vmatpush1.bf16.msra.mxu0 %v1419
        %1646 = vmatprep.subr.bf16.mxu0 %v1416
        %1647 = vmatpush1.bf16.msra.mxu0 %v1415
        %1648 = vmatprep.subr.bf16.mxu0 %v1412
        %1649 = vmatpush1.bf16.msra.mxu0 %v1411
        %1650 = vmatprep.subr.bf16.mxu0 %v1408
        %1651 = vmatpush1.bf16.msra.mxu0 %v1407
        %1652 = vmatprep.subr.bf16.mxu0 %v1404
        %1653 = vmatpush1.bf16.msra.mxu0 %v1403
        %1654 = vmatprep.subr.bf16.mxu0 %v1464
        %1655 = vmatpush2.bf16.msra.mxu0 %v1463
        %1656 = vmatprep.subr.bf16.mxu0 %v1460
        %1657 = vmatpush2.bf16.msra.mxu0 %v1459
        %1658 = vmatprep.subr.bf16.mxu0 %v1456
        %1659 = vmatpush2.bf16.msra.mxu0 %v1455
        %1660 = vmatprep.subr.bf16.mxu0 %v1452
        %1661 = vmatpush2.bf16.msra.mxu0 %v1451
        %1662 = vmatprep.subr.bf16.mxu0 %v1448
        %1663 = vmatpush2.bf16.msra.mxu0 %v1447
        %1664 = vmatprep.subr.bf16.mxu0 %v1444
        %1665 = vmatpush2.bf16.msra.mxu0 %v1443
        %1666 = vmatprep.subr.bf16.mxu0 %v1440
        %1667 = vmatpush2.bf16.msra.mxu0 %v1439
        %1668 = vmatprep.subr.bf16.mxu0 %v1436
        %1669 = vmatpush2.bf16.msra.mxu0 %v1435
        %1670 = vmatprep.mubr.bf16.mxu0 %v800
        %1671 = vmatmul.mubr.bf16.gmra.mxu0 %v799
        %v1672 = vpop.f32.mrf.mxu0
        %v1673 = vadd.f32 %v1630, %v1672
        %v1674 = vpop.f32.mrf.mxu0
        %v1675 = vadd.f32 %v1632, %v1674
        %v1676 = vpop.f32.mrf.mxu0
        %v1677 = vadd.f32 %v1634, %v1676
        %v1678 = vpop.f32.mrf.mxu0
        %v1679 = vadd.f32 %v1636, %v1678
        %1680 = vdwg.mxu0
        %1681 = vmatprep.subr.bf16.mxu0 %v1370
        %1682 = vmatpush1.bf16.msra.mxu0 %v1369
        %1683 = vmatprep.subr.bf16.mxu0 %v1366
        %1684 = vmatpush1.bf16.msra.mxu0 %v1365
        %1685 = vmatprep.subr.bf16.mxu0 %v1362
        %1686 = vmatpush1.bf16.msra.mxu0 %v1361
        %1687 = vmatprep.subr.bf16.mxu0 %v1358
        %1688 = vmatpush1.bf16.msra.mxu0 %v1357
        %1689 = vmatprep.subr.bf16.mxu0 %v1354
        %1690 = vmatpush1.bf16.msra.mxu0 %v1353
        %1691 = vmatprep.subr.bf16.mxu0 %v1350
        %1692 = vmatpush1.bf16.msra.mxu0 %v1349
        %1693 = vmatprep.subr.bf16.mxu0 %v1346
        %1694 = vmatpush1.bf16.msra.mxu0 %v1345
        %1695 = vmatprep.subr.bf16.mxu0 %v1342
        %1696 = vmatpush1.bf16.msra.mxu0 %v1341
        %1697 = vmatprep.subr.bf16.mxu0 %v1402
        %1698 = vmatpush2.bf16.msra.mxu0 %v1401
        %1699 = vmatprep.subr.bf16.mxu0 %v1398
        %1700 = vmatpush2.bf16.msra.mxu0 %v1397
        %1701 = vmatprep.subr.bf16.mxu0 %v1394
        %1702 = vmatpush2.bf16.msra.mxu0 %v1393
        %1703 = vmatprep.subr.bf16.mxu0 %v1390
        %1704 = vmatpush2.bf16.msra.mxu0 %v1389
        %1705 = vmatprep.subr.bf16.mxu0 %v1386
        %1706 = vmatpush2.bf16.msra.mxu0 %v1385
        %1707 = vmatprep.subr.bf16.mxu0 %v1382
        %1708 = vmatpush2.bf16.msra.mxu0 %v1381
        %1709 = vmatprep.subr.bf16.mxu0 %v1378
        %1710 = vmatpush2.bf16.msra.mxu0 %v1377
        %1711 = vmatprep.subr.bf16.mxu0 %v1374
        %1712 = vmatpush2.bf16.msra.mxu0 %v1373
        %1713 = vmatprep.mubr.bf16.mxu0 %v798
        %1714 = vmatmul.mubr.bf16.gmra.mxu0 %v797
        %v1715 = vpop.f32.mrf.mxu0
        %v1716 = vadd.f32 %v946, %v1715
        %v1717 = vpop.f32.mrf.mxu0
        %v1718 = vadd.f32 %v950, %v1717
        %v1719 = vpop.f32.mrf.mxu0
        %v1720 = vadd.f32 %v946, %v1719
        %v1721 = vpop.f32.mrf.mxu0
        %v1722 = vadd.f32 %v950, %v1721
        %1723 = vdwg.mxu0
        %1724 = vmatprep.subr.bf16.mxu0 %v1434
        %1725 = vmatpush1.bf16.msra.mxu0 %v1433
        %1726 = vmatprep.subr.bf16.mxu0 %v1430
        %1727 = vmatpush1.bf16.msra.mxu0 %v1429
        %1728 = vmatprep.subr.bf16.mxu0 %v1426
        %1729 = vmatpush1.bf16.msra.mxu0 %v1425
        %1730 = vmatprep.subr.bf16.mxu0 %v1422
        %1731 = vmatpush1.bf16.msra.mxu0 %v1421
        %1732 = vmatprep.subr.bf16.mxu0 %v1418
        %1733 = vmatpush1.bf16.msra.mxu0 %v1417
        %1734 = vmatprep.subr.bf16.mxu0 %v1414
        %1735 = vmatpush1.bf16.msra.mxu0 %v1413
        %1736 = vmatprep.subr.bf16.mxu0 %v1410
        %1737 = vmatpush1.bf16.msra.mxu0 %v1409
        %1738 = vmatprep.subr.bf16.mxu0 %v1406
        %1739 = vmatpush1.bf16.msra.mxu0 %v1405
        %1740 = vmatprep.subr.bf16.mxu0 %v1466
        %1741 = vmatpush2.bf16.msra.mxu0 %v1465
        %1742 = vmatprep.subr.bf16.mxu0 %v1462
        %1743 = vmatpush2.bf16.msra.mxu0 %v1461
        %1744 = vmatprep.subr.bf16.mxu0 %v1458
        %1745 = vmatpush2.bf16.msra.mxu0 %v1457
        %1746 = vmatprep.subr.bf16.mxu0 %v1454
        %1747 = vmatpush2.bf16.msra.mxu0 %v1453
        %1748 = vmatprep.subr.bf16.mxu0 %v1450
        %1749 = vmatpush2.bf16.msra.mxu0 %v1449
        %1750 = vmatprep.subr.bf16.mxu0 %v1446
        %1751 = vmatpush2.bf16.msra.mxu0 %v1445
        %1752 = vmatprep.subr.bf16.mxu0 %v1442
        %1753 = vmatpush2.bf16.msra.mxu0 %v1441
        %1754 = vmatprep.subr.bf16.mxu0 %v1438
        %1755 = vmatpush2.bf16.msra.mxu0 %v1437
        %1756 = vmatprep.mubr.bf16.mxu0 %v800
        %1757 = vmatmul.mubr.bf16.gmra.mxu0 %v799
        %v1758 = vpop.f32.mrf.mxu0
        %v1759 = vadd.f32 %v1716, %v1758
        %v1760 = vpop.f32.mrf.mxu0
        %v1761 = vadd.f32 %v1718, %v1760
        %v1762 = vpop.f32.mrf.mxu0
        %v1763 = vadd.f32 %v1720, %v1762
        %v1764 = vpop.f32.mrf.mxu0
        %v1765 = vadd.f32 %v1722, %v1764
        %1766 = vdwg.mxu0
        %v1767 = vmax.f32 %v1673, 0.0
        %v1768 = vmax.f32 %v1675, 0.0
        %v1769 = vmax.f32 %v1759, 0.0
        %v1770 = vmax.f32 %v1761, 0.0
        %v1771 = vmax.f32 %v1677, 0.0
        %v1772 = vmax.f32 %v1679, 0.0
        %v1773 = vmax.f32 %v1763, 0.0
        %v1774 = vmax.f32 %v1765, 0.0
        %v1775 = vld [vmem:[#allocation5] sm:$0xff]
        %v1776 = vld [vmem:[#allocation5 + $0x8] sm:$0xff]
        %v1777 = vld [vmem:[#allocation5 + $0x10] sm:$0xff]
        %v1778 = vld [vmem:[#allocation5 + $0x18] sm:$0xff]
        %v1779 = vld [vmem:[#allocation5 + $0x20] sm:$0xff]
        %v1780 = vld [vmem:[#allocation5 + $0x28] sm:$0xff]
        %v1781 = vld [vmem:[#allocation5 + $0x30] sm:$0xff]
        %v1782 = vld [vmem:[#allocation5 + $0x38] sm:$0xff]
        %v1783 = vld [vmem:[#allocation5 + $0x40] sm:$0xff]
        %v1784 = vld [vmem:[#allocation5 + $0x48] sm:$0xff]
        %v1785 = vld [vmem:[#allocation5 + $0x50] sm:$0xff]
        %v1786 = vld [vmem:[#allocation5 + $0x58] sm:$0xff]
        %v1787 = vld [vmem:[#allocation5 + $0x60] sm:$0xff]
        %v1788 = vld [vmem:[#allocation5 + $0x68] sm:$0xff]
        %v1789 = vld [vmem:[#allocation5 + $0x70] sm:$0xff]
        %v1790 = vld [vmem:[#allocation5 + $0x78] sm:$0xff]
        %v1791 = vld [vmem:[#allocation5 + $0x80] sm:$0xff]
        %v1792 = vld [vmem:[#allocation5 + $0x88] sm:$0xff]
        %v1793 = vld [vmem:[#allocation5 + $0x90] sm:$0xff]
        %v1794 = vld [vmem:[#allocation5 + $0x98] sm:$0xff]
        %v1795 = vld [vmem:[#allocation5 + $0xa0] sm:$0xff]
        %v1796 = vld [vmem:[#allocation5 + $0xa8] sm:$0xff]
        %v1797 = vld [vmem:[#allocation5 + $0xb0] sm:$0xff]
        %v1798 = vld [vmem:[#allocation5 + $0xb8] sm:$0xff]
        %v1799 = vld [vmem:[#allocation5 + $0xc0] sm:$0xff]
        %v1800 = vld [vmem:[#allocation5 + $0xc8] sm:$0xff]
        %v1801 = vld [vmem:[#allocation5 + $0xd0] sm:$0xff]
        %v1802 = vld [vmem:[#allocation5 + $0xd8] sm:$0xff]
        %v1803 = vld [vmem:[#allocation5 + $0xe0] sm:$0xff]
        %v1804 = vld [vmem:[#allocation5 + $0xe8] sm:$0xff]
        %v1805 = vld [vmem:[#allocation5 + $0xf0] sm:$0xff]
        %v1806 = vld [vmem:[#allocation5 + $0xf8] sm:$0xff]
        %v1807 = vld [vmem:[#allocation5 + $0x100] sm:$0xff]
        %v1808 = vld [vmem:[#allocation5 + $0x108] sm:$0xff]
        %v1809 = vld [vmem:[#allocation5 + $0x110] sm:$0xff]
        %v1810 = vld [vmem:[#allocation5 + $0x118] sm:$0xff]
        %v1811 = vld [vmem:[#allocation5 + $0x120] sm:$0xff]
        %v1812 = vld [vmem:[#allocation5 + $0x128] sm:$0xff]
        %v1813 = vld [vmem:[#allocation5 + $0x130] sm:$0xff]
        %v1814 = vld [vmem:[#allocation5 + $0x138] sm:$0xff]
        %v1815 = vld [vmem:[#allocation5 + $0x140] sm:$0xff]
        %v1816 = vld [vmem:[#allocation5 + $0x148] sm:$0xff]
        %v1817 = vld [vmem:[#allocation5 + $0x150] sm:$0xff]
        %v1818 = vld [vmem:[#allocation5 + $0x158] sm:$0xff]
        %v1819 = vld [vmem:[#allocation5 + $0x160] sm:$0xff]
        %v1820 = vld [vmem:[#allocation5 + $0x168] sm:$0xff]
        %v1821 = vld [vmem:[#allocation5 + $0x170] sm:$0xff]
        %v1822 = vld [vmem:[#allocation5 + $0x178] sm:$0xff]
        %v1823 = vld [vmem:[#allocation5 + $0x180] sm:$0xff]
        %v1824 = vld [vmem:[#allocation5 + $0x188] sm:$0xff]
        %v1825 = vld [vmem:[#allocation5 + $0x190] sm:$0xff]
        %v1826 = vld [vmem:[#allocation5 + $0x198] sm:$0xff]
        %v1827 = vld [vmem:[#allocation5 + $0x1a0] sm:$0xff]
        %v1828 = vld [vmem:[#allocation5 + $0x1a8] sm:$0xff]
        %v1829 = vld [vmem:[#allocation5 + $0x1b0] sm:$0xff]
        %v1830 = vld [vmem:[#allocation5 + $0x1b8] sm:$0xff]
        %v1831 = vld [vmem:[#allocation5 + $0x1c0] sm:$0xff]
        %v1832 = vld [vmem:[#allocation5 + $0x1c8] sm:$0xff]
        %v1833 = vld [vmem:[#allocation5 + $0x1d0] sm:$0xff]
        %v1834 = vld [vmem:[#allocation5 + $0x1d8] sm:$0xff]
        %v1835 = vld [vmem:[#allocation5 + $0x1e0] sm:$0xff]
        %v1836 = vld [vmem:[#allocation5 + $0x1e8] sm:$0xff]
        %v1837 = vld [vmem:[#allocation5 + $0x1f0] sm:$0xff]
        %v1838 = vld [vmem:[#allocation5 + $0x1f8] sm:$0xff]
        %v1839 = vld [vmem:[#allocation5 + $0x200] sm:$0xff]
        %v1840 = vld [vmem:[#allocation5 + $0x208] sm:$0xff]
        %v1841 = vld [vmem:[#allocation5 + $0x210] sm:$0xff]
        %v1842 = vld [vmem:[#allocation5 + $0x218] sm:$0xff]
        %v1843 = vld [vmem:[#allocation5 + $0x220] sm:$0xff]
        %v1844 = vld [vmem:[#allocation5 + $0x228] sm:$0xff]
        %v1845 = vld [vmem:[#allocation5 + $0x230] sm:$0xff]
        %v1846 = vld [vmem:[#allocation5 + $0x238] sm:$0xff]
        %v1847 = vld [vmem:[#allocation5 + $0x240] sm:$0xff]
        %v1848 = vld [vmem:[#allocation5 + $0x248] sm:$0xff]
        %v1849 = vld [vmem:[#allocation5 + $0x250] sm:$0xff]
        %v1850 = vld [vmem:[#allocation5 + $0x258] sm:$0xff]
        %v1851 = vld [vmem:[#allocation5 + $0x260] sm:$0xff]
        %v1852 = vld [vmem:[#allocation5 + $0x268] sm:$0xff]
        %v1853 = vld [vmem:[#allocation5 + $0x270] sm:$0xff]
        %v1854 = vld [vmem:[#allocation5 + $0x278] sm:$0xff]
        %v1855 = vld [vmem:[#allocation5 + $0x280] sm:$0xff]
        %v1856 = vld [vmem:[#allocation5 + $0x288] sm:$0xff]
        %v1857 = vld [vmem:[#allocation5 + $0x290] sm:$0xff]
        %v1858 = vld [vmem:[#allocation5 + $0x298] sm:$0xff]
        %v1859 = vld [vmem:[#allocation5 + $0x2a0] sm:$0xff]
        %v1860 = vld [vmem:[#allocation5 + $0x2a8] sm:$0xff]
        %v1861 = vld [vmem:[#allocation5 + $0x2b0] sm:$0xff]
        %v1862 = vld [vmem:[#allocation5 + $0x2b8] sm:$0xff]
        %v1863 = vld [vmem:[#allocation5 + $0x2c0] sm:$0xff]
        %v1864 = vld [vmem:[#allocation5 + $0x2c8] sm:$0xff]
        %v1865 = vld [vmem:[#allocation5 + $0x2d0] sm:$0xff]
        %v1866 = vld [vmem:[#allocation5 + $0x2d8] sm:$0xff]
        %v1867 = vld [vmem:[#allocation5 + $0x2e0] sm:$0xff]
        %v1868 = vld [vmem:[#allocation5 + $0x2e8] sm:$0xff]
        %v1869 = vld [vmem:[#allocation5 + $0x2f0] sm:$0xff]
        %v1870 = vld [vmem:[#allocation5 + $0x2f8] sm:$0xff]
        %v1871 = vld [vmem:[#allocation5 + $0x300] sm:$0xff]
        %v1872 = vld [vmem:[#allocation5 + $0x308] sm:$0xff]
        %v1873 = vld [vmem:[#allocation5 + $0x310] sm:$0xff]
        %v1874 = vld [vmem:[#allocation5 + $0x318] sm:$0xff]
        %v1875 = vld [vmem:[#allocation5 + $0x320] sm:$0xff]
        %v1876 = vld [vmem:[#allocation5 + $0x328] sm:$0xff]
        %v1877 = vld [vmem:[#allocation5 + $0x330] sm:$0xff]
        %v1878 = vld [vmem:[#allocation5 + $0x338] sm:$0xff]
        %v1879 = vld [vmem:[#allocation5 + $0x340] sm:$0xff]
        %v1880 = vld [vmem:[#allocation5 + $0x348] sm:$0xff]
        %v1881 = vld [vmem:[#allocation5 + $0x350] sm:$0xff]
        %v1882 = vld [vmem:[#allocation5 + $0x358] sm:$0xff]
        %v1883 = vld [vmem:[#allocation5 + $0x360] sm:$0xff]
        %v1884 = vld [vmem:[#allocation5 + $0x368] sm:$0xff]
        %v1885 = vld [vmem:[#allocation5 + $0x370] sm:$0xff]
        %v1886 = vld [vmem:[#allocation5 + $0x378] sm:$0xff]
        %v1887 = vld [vmem:[#allocation5 + $0x380] sm:$0xff]
        %v1888 = vld [vmem:[#allocation5 + $0x388] sm:$0xff]
        %v1889 = vld [vmem:[#allocation5 + $0x390] sm:$0xff]
        %v1890 = vld [vmem:[#allocation5 + $0x398] sm:$0xff]
        %v1891 = vld [vmem:[#allocation5 + $0x3a0] sm:$0xff]
        %v1892 = vld [vmem:[#allocation5 + $0x3a8] sm:$0xff]
        %v1893 = vld [vmem:[#allocation5 + $0x3b0] sm:$0xff]
        %v1894 = vld [vmem:[#allocation5 + $0x3b8] sm:$0xff]
        %v1895 = vld [vmem:[#allocation5 + $0x3c0] sm:$0xff]
        %v1896 = vld [vmem:[#allocation5 + $0x3c8] sm:$0xff]
        %v1897 = vld [vmem:[#allocation5 + $0x3d0] sm:$0xff]
        %v1898 = vld [vmem:[#allocation5 + $0x3d8] sm:$0xff]
        %v1899 = vld [vmem:[#allocation5 + $0x3e0] sm:$0xff]
        %v1900 = vld [vmem:[#allocation5 + $0x3e8] sm:$0xff]
        %v1901 = vld [vmem:[#allocation5 + $0x3f0] sm:$0xff]
        %v1902 = vld [vmem:[#allocation5 + $0x3f8] sm:$0xff]
        %v1903 = vld [vmem:[%s6] sm:$0xf]
        %v1905 = vlaneseq
        %v1906 = vshrl.u32 %v1905, 7
        %v1907 = vsub.s32 0, %v1906
        %v1908 = vrot.slane %v1903, %v1907
        %v1909 = vlaneseq
        %v1910 = vshrl.u32 %v1909, 7
        %v1911 = vsub.s32 1, %v1910
        %v1912 = vrot.slane %v1903, %v1911
        %v1913 = vlaneseq
        %v1914 = vshrl.u32 %v1913, 7
        %v1915 = vsub.s32 2, %v1914
        %v1916 = vrot.slane %v1903, %v1915
        %v1917 = vlaneseq
        %v1918 = vshrl.u32 %v1917, 7
        %v1919 = vsub.s32 3, %v1918
        %v1920 = vrot.slane %v1903, %v1919
        %v2053 = vunpack.c.l.b16 %v1775
        %v2054 = vunpack.c.h.b16 %v1775
        %v2055 = vunpack.c.l.b16 %v1776
        %v2056 = vunpack.c.h.b16 %v1776
        %v2057 = vunpack.c.l.b16 %v1777
        %v2058 = vunpack.c.h.b16 %v1777
        %v2059 = vunpack.c.l.b16 %v1778
        %v2060 = vunpack.c.h.b16 %v1778
        %v2061 = vunpack.c.l.b16 %v1779
        %v2062 = vunpack.c.h.b16 %v1779
        %v2063 = vunpack.c.l.b16 %v1780
        %v2064 = vunpack.c.h.b16 %v1780
        %v2065 = vunpack.c.l.b16 %v1781
        %v2066 = vunpack.c.h.b16 %v1781
        %v2067 = vunpack.c.l.b16 %v1782
        %v2068 = vunpack.c.h.b16 %v1782
        %v2069 = vunpack.c.l.b16 %v1783
        %v2070 = vunpack.c.h.b16 %v1783
        %v2071 = vunpack.c.l.b16 %v1784
        %v2072 = vunpack.c.h.b16 %v1784
        %v2073 = vunpack.c.l.b16 %v1785
        %v2074 = vunpack.c.h.b16 %v1785
        %v2075 = vunpack.c.l.b16 %v1786
        %v2076 = vunpack.c.h.b16 %v1786
        %v2077 = vunpack.c.l.b16 %v1787
        %v2078 = vunpack.c.h.b16 %v1787
        %v2079 = vunpack.c.l.b16 %v1788
        %v2080 = vunpack.c.h.b16 %v1788
        %v2081 = vunpack.c.l.b16 %v1789
        %v2082 = vunpack.c.h.b16 %v1789
        %v2083 = vunpack.c.l.b16 %v1790
        %v2084 = vunpack.c.h.b16 %v1790
        %v2085 = vunpack.c.l.b16 %v1791
        %v2086 = vunpack.c.h.b16 %v1791
        %v2087 = vunpack.c.l.b16 %v1792
        %v2088 = vunpack.c.h.b16 %v1792
        %v2089 = vunpack.c.l.b16 %v1793
        %v2090 = vunpack.c.h.b16 %v1793
        %v2091 = vunpack.c.l.b16 %v1794
        %v2092 = vunpack.c.h.b16 %v1794
        %v2093 = vunpack.c.l.b16 %v1795
        %v2094 = vunpack.c.h.b16 %v1795
        %v2095 = vunpack.c.l.b16 %v1796
        %v2096 = vunpack.c.h.b16 %v1796
        %v2097 = vunpack.c.l.b16 %v1797
        %v2098 = vunpack.c.h.b16 %v1797
        %v2099 = vunpack.c.l.b16 %v1798
        %v2100 = vunpack.c.h.b16 %v1798
        %v2101 = vunpack.c.l.b16 %v1799
        %v2102 = vunpack.c.h.b16 %v1799
        %v2103 = vunpack.c.l.b16 %v1800
        %v2104 = vunpack.c.h.b16 %v1800
        %v2105 = vunpack.c.l.b16 %v1801
        %v2106 = vunpack.c.h.b16 %v1801
        %v2107 = vunpack.c.l.b16 %v1802
        %v2108 = vunpack.c.h.b16 %v1802
        %v2109 = vunpack.c.l.b16 %v1803
        %v2110 = vunpack.c.h.b16 %v1803
        %v2111 = vunpack.c.l.b16 %v1804
        %v2112 = vunpack.c.h.b16 %v1804
        %v2113 = vunpack.c.l.b16 %v1805
        %v2114 = vunpack.c.h.b16 %v1805
        %v2115 = vunpack.c.l.b16 %v1806
        %v2116 = vunpack.c.h.b16 %v1806
        %v2117 = vunpack.c.l.b16 %v1807
        %v2118 = vunpack.c.h.b16 %v1807
        %v2119 = vunpack.c.l.b16 %v1808
        %v2120 = vunpack.c.h.b16 %v1808
        %v2121 = vunpack.c.l.b16 %v1809
        %v2122 = vunpack.c.h.b16 %v1809
        %v2123 = vunpack.c.l.b16 %v1810
        %v2124 = vunpack.c.h.b16 %v1810
        %v2125 = vunpack.c.l.b16 %v1811
        %v2126 = vunpack.c.h.b16 %v1811
        %v2127 = vunpack.c.l.b16 %v1812
        %v2128 = vunpack.c.h.b16 %v1812
        %v2129 = vunpack.c.l.b16 %v1813
        %v2130 = vunpack.c.h.b16 %v1813
        %v2131 = vunpack.c.l.b16 %v1814
        %v2132 = vunpack.c.h.b16 %v1814
        %v2133 = vunpack.c.l.b16 %v1815
        %v2134 = vunpack.c.h.b16 %v1815
        %v2135 = vunpack.c.l.b16 %v1816
        %v2136 = vunpack.c.h.b16 %v1816
        %v2137 = vunpack.c.l.b16 %v1817
        %v2138 = vunpack.c.h.b16 %v1817
        %v2139 = vunpack.c.l.b16 %v1818
        %v2140 = vunpack.c.h.b16 %v1818
        %v2141 = vunpack.c.l.b16 %v1819
        %v2142 = vunpack.c.h.b16 %v1819
        %v2143 = vunpack.c.l.b16 %v1820
        %v2144 = vunpack.c.h.b16 %v1820
        %v2145 = vunpack.c.l.b16 %v1821
        %v2146 = vunpack.c.h.b16 %v1821
        %v2147 = vunpack.c.l.b16 %v1822
        %v2148 = vunpack.c.h.b16 %v1822
        %v2149 = vunpack.c.l.b16 %v1823
        %v2150 = vunpack.c.h.b16 %v1823
        %v2151 = vunpack.c.l.b16 %v1824
        %v2152 = vunpack.c.h.b16 %v1824
        %v2153 = vunpack.c.l.b16 %v1825
        %v2154 = vunpack.c.h.b16 %v1825
        %v2155 = vunpack.c.l.b16 %v1826
        %v2156 = vunpack.c.h.b16 %v1826
        %v2157 = vunpack.c.l.b16 %v1827
        %v2158 = vunpack.c.h.b16 %v1827
        %v2159 = vunpack.c.l.b16 %v1828
        %v2160 = vunpack.c.h.b16 %v1828
        %v2161 = vunpack.c.l.b16 %v1829
        %v2162 = vunpack.c.h.b16 %v1829
        %v2163 = vunpack.c.l.b16 %v1830
        %v2164 = vunpack.c.h.b16 %v1830
        %v2165 = vunpack.c.l.b16 %v1831
        %v2166 = vunpack.c.h.b16 %v1831
        %v2167 = vunpack.c.l.b16 %v1832
        %v2168 = vunpack.c.h.b16 %v1832
        %v2169 = vunpack.c.l.b16 %v1833
        %v2170 = vunpack.c.h.b16 %v1833
        %v2171 = vunpack.c.l.b16 %v1834
        %v2172 = vunpack.c.h.b16 %v1834
        %v2173 = vunpack.c.l.b16 %v1835
        %v2174 = vunpack.c.h.b16 %v1835
        %v2175 = vunpack.c.l.b16 %v1836
        %v2176 = vunpack.c.h.b16 %v1836
        %v2177 = vunpack.c.l.b16 %v1837
        %v2178 = vunpack.c.h.b16 %v1837
        %v2179 = vunpack.c.l.b16 %v1838
        %v2180 = vunpack.c.h.b16 %v1838
        %v2181 = vunpack.c.l.b16 %v1839
        %v2182 = vunpack.c.h.b16 %v1839
        %v2183 = vunpack.c.l.b16 %v1840
        %v2184 = vunpack.c.h.b16 %v1840
        %v2185 = vunpack.c.l.b16 %v1841
        %v2186 = vunpack.c.h.b16 %v1841
        %v2187 = vunpack.c.l.b16 %v1842
        %v2188 = vunpack.c.h.b16 %v1842
        %v2189 = vunpack.c.l.b16 %v1843
        %v2190 = vunpack.c.h.b16 %v1843
        %v2191 = vunpack.c.l.b16 %v1844
        %v2192 = vunpack.c.h.b16 %v1844
        %v2193 = vunpack.c.l.b16 %v1845
        %v2194 = vunpack.c.h.b16 %v1845
        %v2195 = vunpack.c.l.b16 %v1846
        %v2196 = vunpack.c.h.b16 %v1846
        %v2197 = vunpack.c.l.b16 %v1847
        %v2198 = vunpack.c.h.b16 %v1847
        %v2199 = vunpack.c.l.b16 %v1848
        %v2200 = vunpack.c.h.b16 %v1848
        %v2201 = vunpack.c.l.b16 %v1849
        %v2202 = vunpack.c.h.b16 %v1849
        %v2203 = vunpack.c.l.b16 %v1850
        %v2204 = vunpack.c.h.b16 %v1850
        %v2205 = vunpack.c.l.b16 %v1851
        %v2206 = vunpack.c.h.b16 %v1851
        %v2207 = vunpack.c.l.b16 %v1852
        %v2208 = vunpack.c.h.b16 %v1852
        %v2209 = vunpack.c.l.b16 %v1853
        %v2210 = vunpack.c.h.b16 %v1853
        %v2211 = vunpack.c.l.b16 %v1854
        %v2212 = vunpack.c.h.b16 %v1854
        %v2213 = vunpack.c.l.b16 %v1855
        %v2214 = vunpack.c.h.b16 %v1855
        %v2215 = vunpack.c.l.b16 %v1856
        %v2216 = vunpack.c.h.b16 %v1856
        %v2217 = vunpack.c.l.b16 %v1857
        %v2218 = vunpack.c.h.b16 %v1857
        %v2219 = vunpack.c.l.b16 %v1858
        %v2220 = vunpack.c.h.b16 %v1858
        %v2221 = vunpack.c.l.b16 %v1859
        %v2222 = vunpack.c.h.b16 %v1859
        %v2223 = vunpack.c.l.b16 %v1860
        %v2224 = vunpack.c.h.b16 %v1860
        %v2225 = vunpack.c.l.b16 %v1861
        %v2226 = vunpack.c.h.b16 %v1861
        %v2227 = vunpack.c.l.b16 %v1862
        %v2228 = vunpack.c.h.b16 %v1862
        %v2229 = vunpack.c.l.b16 %v1863
        %v2230 = vunpack.c.h.b16 %v1863
        %v2231 = vunpack.c.l.b16 %v1864
        %v2232 = vunpack.c.h.b16 %v1864
        %v2233 = vunpack.c.l.b16 %v1865
        %v2234 = vunpack.c.h.b16 %v1865
        %v2235 = vunpack.c.l.b16 %v1866
        %v2236 = vunpack.c.h.b16 %v1866
        %v2237 = vunpack.c.l.b16 %v1867
        %v2238 = vunpack.c.h.b16 %v1867
        %v2239 = vunpack.c.l.b16 %v1868
        %v2240 = vunpack.c.h.b16 %v1868
        %v2241 = vunpack.c.l.b16 %v1869
        %v2242 = vunpack.c.h.b16 %v1869
        %v2243 = vunpack.c.l.b16 %v1870
        %v2244 = vunpack.c.h.b16 %v1870
        %v2245 = vunpack.c.l.b16 %v1871
        %v2246 = vunpack.c.h.b16 %v1871
        %v2247 = vunpack.c.l.b16 %v1872
        %v2248 = vunpack.c.h.b16 %v1872
        %v2249 = vunpack.c.l.b16 %v1873
        %v2250 = vunpack.c.h.b16 %v1873
        %v2251 = vunpack.c.l.b16 %v1874
        %v2252 = vunpack.c.h.b16 %v1874
        %v2253 = vunpack.c.l.b16 %v1875
        %v2254 = vunpack.c.h.b16 %v1875
        %v2255 = vunpack.c.l.b16 %v1876
        %v2256 = vunpack.c.h.b16 %v1876
        %v2257 = vunpack.c.l.b16 %v1877
        %v2258 = vunpack.c.h.b16 %v1877
        %v2259 = vunpack.c.l.b16 %v1878
        %v2260 = vunpack.c.h.b16 %v1878
        %v2261 = vunpack.c.l.b16 %v1879
        %v2262 = vunpack.c.h.b16 %v1879
        %v2263 = vunpack.c.l.b16 %v1880
        %v2264 = vunpack.c.h.b16 %v1880
        %v2265 = vunpack.c.l.b16 %v1881
        %v2266 = vunpack.c.h.b16 %v1881
        %v2267 = vunpack.c.l.b16 %v1882
        %v2268 = vunpack.c.h.b16 %v1882
        %v2269 = vunpack.c.l.b16 %v1883
        %v2270 = vunpack.c.h.b16 %v1883
        %v2271 = vunpack.c.l.b16 %v1884
        %v2272 = vunpack.c.h.b16 %v1884
        %v2273 = vunpack.c.l.b16 %v1885
        %v2274 = vunpack.c.h.b16 %v1885
        %v2275 = vunpack.c.l.b16 %v1886
        %v2276 = vunpack.c.h.b16 %v1886
        %v2277 = vunpack.c.l.b16 %v1887
        %v2278 = vunpack.c.h.b16 %v1887
        %v2279 = vunpack.c.l.b16 %v1888
        %v2280 = vunpack.c.h.b16 %v1888
        %v2281 = vunpack.c.l.b16 %v1889
        %v2282 = vunpack.c.h.b16 %v1889
        %v2283 = vunpack.c.l.b16 %v1890
        %v2284 = vunpack.c.h.b16 %v1890
        %v2285 = vunpack.c.l.b16 %v1891
        %v2286 = vunpack.c.h.b16 %v1891
        %v2287 = vunpack.c.l.b16 %v1892
        %v2288 = vunpack.c.h.b16 %v1892
        %v2289 = vunpack.c.l.b16 %v1893
        %v2290 = vunpack.c.h.b16 %v1893
        %v2291 = vunpack.c.l.b16 %v1894
        %v2292 = vunpack.c.h.b16 %v1894
        %v2293 = vunpack.c.l.b16 %v1895
        %v2294 = vunpack.c.h.b16 %v1895
        %v2295 = vunpack.c.l.b16 %v1896
        %v2296 = vunpack.c.h.b16 %v1896
        %v2297 = vunpack.c.l.b16 %v1897
        %v2298 = vunpack.c.h.b16 %v1897
        %v2299 = vunpack.c.l.b16 %v1898
        %v2300 = vunpack.c.h.b16 %v1898
        %v2301 = vunpack.c.l.b16 %v1899
        %v2302 = vunpack.c.h.b16 %v1899
        %v2303 = vunpack.c.l.b16 %v1900
        %v2304 = vunpack.c.h.b16 %v1900
        %v2305 = vunpack.c.l.b16 %v1901
        %v2306 = vunpack.c.h.b16 %v1901
        %v2307 = vunpack.c.l.b16 %v1902
        %v2308 = vunpack.c.h.b16 %v1902
        %v2309 = vpack.c.b16 %v2057, %v2053
        %v2310 = vpack.c.b16 %v2058, %v2054
        %v2311 = vpack.c.b16 %v2059, %v2055
        %v2312 = vpack.c.b16 %v2060, %v2056
        %v2313 = vpack.c.b16 %v2065, %v2061
        %v2314 = vpack.c.b16 %v2066, %v2062
        %v2315 = vpack.c.b16 %v2067, %v2063
        %v2316 = vpack.c.b16 %v2068, %v2064
        %v2317 = vpack.c.b16 %v2073, %v2069
        %v2318 = vpack.c.b16 %v2074, %v2070
        %v2319 = vpack.c.b16 %v2075, %v2071
        %v2320 = vpack.c.b16 %v2076, %v2072
        %v2321 = vpack.c.b16 %v2081, %v2077
        %v2322 = vpack.c.b16 %v2082, %v2078
        %v2323 = vpack.c.b16 %v2083, %v2079
        %v2324 = vpack.c.b16 %v2084, %v2080
        %v2325 = vpack.c.b16 %v2089, %v2085
        %v2326 = vpack.c.b16 %v2090, %v2086
        %v2327 = vpack.c.b16 %v2091, %v2087
        %v2328 = vpack.c.b16 %v2092, %v2088
        %v2329 = vpack.c.b16 %v2097, %v2093
        %v2330 = vpack.c.b16 %v2098, %v2094
        %v2331 = vpack.c.b16 %v2099, %v2095
        %v2332 = vpack.c.b16 %v2100, %v2096
        %v2333 = vpack.c.b16 %v2105, %v2101
        %v2334 = vpack.c.b16 %v2106, %v2102
        %v2335 = vpack.c.b16 %v2107, %v2103
        %v2336 = vpack.c.b16 %v2108, %v2104
        %v2337 = vpack.c.b16 %v2113, %v2109
        %v2338 = vpack.c.b16 %v2114, %v2110
        %v2339 = vpack.c.b16 %v2115, %v2111
        %v2340 = vpack.c.b16 %v2116, %v2112
        %v2341 = vpack.c.b16 %v2121, %v2117
        %v2342 = vpack.c.b16 %v2122, %v2118
        %v2343 = vpack.c.b16 %v2123, %v2119
        %v2344 = vpack.c.b16 %v2124, %v2120
        %v2345 = vpack.c.b16 %v2129, %v2125
        %v2346 = vpack.c.b16 %v2130, %v2126
        %v2347 = vpack.c.b16 %v2131, %v2127
        %v2348 = vpack.c.b16 %v2132, %v2128
        %v2349 = vpack.c.b16 %v2137, %v2133
        %v2350 = vpack.c.b16 %v2138, %v2134
        %v2351 = vpack.c.b16 %v2139, %v2135
        %v2352 = vpack.c.b16 %v2140, %v2136
        %v2353 = vpack.c.b16 %v2145, %v2141
        %v2354 = vpack.c.b16 %v2146, %v2142
        %v2355 = vpack.c.b16 %v2147, %v2143
        %v2356 = vpack.c.b16 %v2148, %v2144
        %v2357 = vpack.c.b16 %v2153, %v2149
        %v2358 = vpack.c.b16 %v2154, %v2150
        %v2359 = vpack.c.b16 %v2155, %v2151
        %v2360 = vpack.c.b16 %v2156, %v2152
        %v2361 = vpack.c.b16 %v2161, %v2157
        %v2362 = vpack.c.b16 %v2162, %v2158
        %v2363 = vpack.c.b16 %v2163, %v2159
        %v2364 = vpack.c.b16 %v2164, %v2160
        %v2365 = vpack.c.b16 %v2169, %v2165
        %v2366 = vpack.c.b16 %v2170, %v2166
        %v2367 = vpack.c.b16 %v2171, %v2167
        %v2368 = vpack.c.b16 %v2172, %v2168
        %v2369 = vpack.c.b16 %v2177, %v2173
        %v2370 = vpack.c.b16 %v2178, %v2174
        %v2371 = vpack.c.b16 %v2179, %v2175
        %v2372 = vpack.c.b16 %v2180, %v2176
        %v2373 = vpack.c.b16 %v2185, %v2181
        %v2374 = vpack.c.b16 %v2186, %v2182
        %v2375 = vpack.c.b16 %v2187, %v2183
        %v2376 = vpack.c.b16 %v2188, %v2184
        %v2377 = vpack.c.b16 %v2193, %v2189
        %v2378 = vpack.c.b16 %v2194, %v2190
        %v2379 = vpack.c.b16 %v2195, %v2191
        %v2380 = vpack.c.b16 %v2196, %v2192
        %v2381 = vpack.c.b16 %v2201, %v2197
        %v2382 = vpack.c.b16 %v2202, %v2198
        %v2383 = vpack.c.b16 %v2203, %v2199
        %v2384 = vpack.c.b16 %v2204, %v2200
        %v2385 = vpack.c.b16 %v2209, %v2205
        %v2386 = vpack.c.b16 %v2210, %v2206
        %v2387 = vpack.c.b16 %v2211, %v2207
        %v2388 = vpack.c.b16 %v2212, %v2208
        %v2389 = vpack.c.b16 %v2217, %v2213
        %v2390 = vpack.c.b16 %v2218, %v2214
        %v2391 = vpack.c.b16 %v2219, %v2215
        %v2392 = vpack.c.b16 %v2220, %v2216
        %v2393 = vpack.c.b16 %v2225, %v2221
        %v2394 = vpack.c.b16 %v2226, %v2222
        %v2395 = vpack.c.b16 %v2227, %v2223
        %v2396 = vpack.c.b16 %v2228, %v2224
        %v2397 = vpack.c.b16 %v2233, %v2229
        %v2398 = vpack.c.b16 %v2234, %v2230
        %v2399 = vpack.c.b16 %v2235, %v2231
        %v2400 = vpack.c.b16 %v2236, %v2232
        %v2401 = vpack.c.b16 %v2241, %v2237
        %v2402 = vpack.c.b16 %v2242, %v2238
        %v2403 = vpack.c.b16 %v2243, %v2239
        %v2404 = vpack.c.b16 %v2244, %v2240
        %v2405 = vpack.c.b16 %v2249, %v2245
        %v2406 = vpack.c.b16 %v2250, %v2246
        %v2407 = vpack.c.b16 %v2251, %v2247
        %v2408 = vpack.c.b16 %v2252, %v2248
        %v2409 = vpack.c.b16 %v2257, %v2253
        %v2410 = vpack.c.b16 %v2258, %v2254
        %v2411 = vpack.c.b16 %v2259, %v2255
        %v2412 = vpack.c.b16 %v2260, %v2256
        %v2413 = vpack.c.b16 %v2265, %v2261
        %v2414 = vpack.c.b16 %v2266, %v2262
        %v2415 = vpack.c.b16 %v2267, %v2263
        %v2416 = vpack.c.b16 %v2268, %v2264
        %v2417 = vpack.c.b16 %v2273, %v2269
        %v2418 = vpack.c.b16 %v2274, %v2270
        %v2419 = vpack.c.b16 %v2275, %v2271
        %v2420 = vpack.c.b16 %v2276, %v2272
        %v2421 = vpack.c.b16 %v2281, %v2277
        %v2422 = vpack.c.b16 %v2282, %v2278
        %v2423 = vpack.c.b16 %v2283, %v2279
        %v2424 = vpack.c.b16 %v2284, %v2280
        %v2425 = vpack.c.b16 %v2289, %v2285
        %v2426 = vpack.c.b16 %v2290, %v2286
        %v2427 = vpack.c.b16 %v2291, %v2287
        %v2428 = vpack.c.b16 %v2292, %v2288
        %v2429 = vpack.c.b16 %v2297, %v2293
        %v2430 = vpack.c.b16 %v2298, %v2294
        %v2431 = vpack.c.b16 %v2299, %v2295
        %v2432 = vpack.c.b16 %v2300, %v2296
        %v2433 = vpack.c.b16 %v2305, %v2301
        %v2434 = vpack.c.b16 %v2306, %v2302
        %v2435 = vpack.c.b16 %v2307, %v2303
        %v2436 = vpack.c.b16 %v2308, %v2304
        %2565 = vmatprep.subr.bf16.mxu0 %v2338
        %2566 = vmatpush1.bf16.msra.mxu0 %v2337
        %2567 = vmatprep.subr.bf16.mxu0 %v2334
        %2568 = vmatpush1.bf16.msra.mxu0 %v2333
        %2569 = vmatprep.subr.bf16.mxu0 %v2330
        %2570 = vmatpush1.bf16.msra.mxu0 %v2329
        %2571 = vmatprep.subr.bf16.mxu0 %v2326
        %2572 = vmatpush1.bf16.msra.mxu0 %v2325
        %2573 = vmatprep.subr.bf16.mxu0 %v2322
        %2574 = vmatpush1.bf16.msra.mxu0 %v2321
        %2575 = vmatprep.subr.bf16.mxu0 %v2318
        %2576 = vmatpush1.bf16.msra.mxu0 %v2317
        %2577 = vmatprep.subr.bf16.mxu0 %v2314
        %2578 = vmatpush1.bf16.msra.mxu0 %v2313
        %2579 = vmatprep.subr.bf16.mxu0 %v2310
        %2580 = vmatpush1.bf16.msra.mxu0 %v2309
        %2581 = vmatprep.subr.bf16.mxu0 %v2370
        %2582 = vmatpush2.bf16.msra.mxu0 %v2369
        %2583 = vmatprep.subr.bf16.mxu0 %v2366
        %2584 = vmatpush2.bf16.msra.mxu0 %v2365
        %2585 = vmatprep.subr.bf16.mxu0 %v2362
        %2586 = vmatpush2.bf16.msra.mxu0 %v2361
        %2587 = vmatprep.subr.bf16.mxu0 %v2358
        %2588 = vmatpush2.bf16.msra.mxu0 %v2357
        %2589 = vmatprep.subr.bf16.mxu0 %v2354
        %2590 = vmatpush2.bf16.msra.mxu0 %v2353
        %2591 = vmatprep.subr.bf16.mxu0 %v2350
        %2592 = vmatpush2.bf16.msra.mxu0 %v2349
        %2593 = vmatprep.subr.bf16.mxu0 %v2346
        %2594 = vmatpush2.bf16.msra.mxu0 %v2345
        %2595 = vmatprep.subr.bf16.mxu0 %v2342
        %2596 = vmatpush2.bf16.msra.mxu0 %v2341
        %2597 = vmatprep.mubr.bf16.mxu0 %v802
        %2598 = vmatmul.mubr.bf16.gmra.mxu0 %v801
        %v2599 = vpop.f32.mrf.mxu0
        %v2600 = vadd.f32 %v1908, %v2599
        %v2601 = vpop.f32.mrf.mxu0
        %v2602 = vadd.f32 %v1912, %v2601
        %v2603 = vpop.f32.mrf.mxu0
        %v2604 = vadd.f32 %v1908, %v2603
        %v2605 = vpop.f32.mrf.mxu0
        %v2606 = vadd.f32 %v1912, %v2605
        %2607 = vdwg.mxu0
        %2608 = vmatprep.subr.bf16.mxu0 %v2402
        %2609 = vmatpush1.bf16.msra.mxu0 %v2401
        %2610 = vmatprep.subr.bf16.mxu0 %v2398
        %2611 = vmatpush1.bf16.msra.mxu0 %v2397
        %2612 = vmatprep.subr.bf16.mxu0 %v2394
        %2613 = vmatpush1.bf16.msra.mxu0 %v2393
        %2614 = vmatprep.subr.bf16.mxu0 %v2390
        %2615 = vmatpush1.bf16.msra.mxu0 %v2389
        %2616 = vmatprep.subr.bf16.mxu0 %v2386
        %2617 = vmatpush1.bf16.msra.mxu0 %v2385
        %2618 = vmatprep.subr.bf16.mxu0 %v2382
        %2619 = vmatpush1.bf16.msra.mxu0 %v2381
        %2620 = vmatprep.subr.bf16.mxu0 %v2378
        %2621 = vmatpush1.bf16.msra.mxu0 %v2377
        %2622 = vmatprep.subr.bf16.mxu0 %v2374
        %2623 = vmatpush1.bf16.msra.mxu0 %v2373
        %2624 = vmatprep.subr.bf16.mxu0 %v2434
        %2625 = vmatpush2.bf16.msra.mxu0 %v2433
        %2626 = vmatprep.subr.bf16.mxu0 %v2430
        %2627 = vmatpush2.bf16.msra.mxu0 %v2429
        %2628 = vmatprep.subr.bf16.mxu0 %v2426
        %2629 = vmatpush2.bf16.msra.mxu0 %v2425
        %2630 = vmatprep.subr.bf16.mxu0 %v2422
        %2631 = vmatpush2.bf16.msra.mxu0 %v2421
        %2632 = vmatprep.subr.bf16.mxu0 %v2418
        %2633 = vmatpush2.bf16.msra.mxu0 %v2417
        %2634 = vmatprep.subr.bf16.mxu0 %v2414
        %2635 = vmatpush2.bf16.msra.mxu0 %v2413
        %2636 = vmatprep.subr.bf16.mxu0 %v2410
        %2637 = vmatpush2.bf16.msra.mxu0 %v2409
        %2638 = vmatprep.subr.bf16.mxu0 %v2406
        %2639 = vmatpush2.bf16.msra.mxu0 %v2405
        %2640 = vmatprep.mubr.bf16.mxu0 %v804
        %2641 = vmatmul.mubr.bf16.gmra.mxu0 %v803
        %v2642 = vpop.f32.mrf.mxu0
        %v2643 = vadd.f32 %v2600, %v2642
        %v2644 = vpop.f32.mrf.mxu0
        %v2645 = vadd.f32 %v2602, %v2644
        %v2646 = vpop.f32.mrf.mxu0
        %v2647 = vadd.f32 %v2604, %v2646
        %v2648 = vpop.f32.mrf.mxu0
        %v2649 = vadd.f32 %v2606, %v2648
        %2650 = vdwg.mxu0
        %2651 = vmatprep.subr.bf16.mxu0 %v2340
        %2652 = vmatpush1.bf16.msra.mxu0 %v2339
        %2653 = vmatprep.subr.bf16.mxu0 %v2336
        %2654 = vmatpush1.bf16.msra.mxu0 %v2335
        %2655 = vmatprep.subr.bf16.mxu0 %v2332
        %2656 = vmatpush1.bf16.msra.mxu0 %v2331
        %2657 = vmatprep.subr.bf16.mxu0 %v2328
        %2658 = vmatpush1.bf16.msra.mxu0 %v2327
        %2659 = vmatprep.subr.bf16.mxu0 %v2324
        %2660 = vmatpush1.bf16.msra.mxu0 %v2323
        %2661 = vmatprep.subr.bf16.mxu0 %v2320
        %2662 = vmatpush1.bf16.msra.mxu0 %v2319
        %2663 = vmatprep.subr.bf16.mxu0 %v2316
        %2664 = vmatpush1.bf16.msra.mxu0 %v2315
        %2665 = vmatprep.subr.bf16.mxu0 %v2312
        %2666 = vmatpush1.bf16.msra.mxu0 %v2311
        %2667 = vmatprep.subr.bf16.mxu0 %v2372
        %2668 = vmatpush2.bf16.msra.mxu0 %v2371
        %2669 = vmatprep.subr.bf16.mxu0 %v2368
        %2670 = vmatpush2.bf16.msra.mxu0 %v2367
        %2671 = vmatprep.subr.bf16.mxu0 %v2364
        %2672 = vmatpush2.bf16.msra.mxu0 %v2363
        %2673 = vmatprep.subr.bf16.mxu0 %v2360
        %2674 = vmatpush2.bf16.msra.mxu0 %v2359
        %2675 = vmatprep.subr.bf16.mxu0 %v2356
        %2676 = vmatpush2.bf16.msra.mxu0 %v2355
        %2677 = vmatprep.subr.bf16.mxu0 %v2352
        %2678 = vmatpush2.bf16.msra.mxu0 %v2351
        %2679 = vmatprep.subr.bf16.mxu0 %v2348
        %2680 = vmatpush2.bf16.msra.mxu0 %v2347
        %2681 = vmatprep.subr.bf16.mxu0 %v2344
        %2682 = vmatpush2.bf16.msra.mxu0 %v2343
        %2683 = vmatprep.mubr.bf16.mxu0 %v802
        %2684 = vmatmul.mubr.bf16.gmra.mxu0 %v801
        %v2685 = vpop.f32.mrf.mxu0
        %v2686 = vadd.f32 %v1916, %v2685
        %v2687 = vpop.f32.mrf.mxu0
        %v2688 = vadd.f32 %v1920, %v2687
        %v2689 = vpop.f32.mrf.mxu0
        %v2690 = vadd.f32 %v1916, %v2689
        %v2691 = vpop.f32.mrf.mxu0
        %v2692 = vadd.f32 %v1920, %v2691
        %2693 = vdwg.mxu0
        %2694 = vmatprep.subr.bf16.mxu0 %v2404
        %2695 = vmatpush1.bf16.msra.mxu0 %v2403
        %2696 = vmatprep.subr.bf16.mxu0 %v2400
        %2697 = vmatpush1.bf16.msra.mxu0 %v2399
        %2698 = vmatprep.subr.bf16.mxu0 %v2396
        %2699 = vmatpush1.bf16.msra.mxu0 %v2395
        %2700 = vmatprep.subr.bf16.mxu0 %v2392
        %2701 = vmatpush1.bf16.msra.mxu0 %v2391
        %2702 = vmatprep.subr.bf16.mxu0 %v2388
        %2703 = vmatpush1.bf16.msra.mxu0 %v2387
        %2704 = vmatprep.subr.bf16.mxu0 %v2384
        %2705 = vmatpush1.bf16.msra.mxu0 %v2383
        %2706 = vmatprep.subr.bf16.mxu0 %v2380
        %2707 = vmatpush1.bf16.msra.mxu0 %v2379
        %2708 = vmatprep.subr.bf16.mxu0 %v2376
        %2709 = vmatpush1.bf16.msra.mxu0 %v2375
        %2710 = vmatprep.subr.bf16.mxu0 %v2436
        %2711 = vmatpush2.bf16.msra.mxu0 %v2435
        %2712 = vmatprep.subr.bf16.mxu0 %v2432
        %2713 = vmatpush2.bf16.msra.mxu0 %v2431
        %2714 = vmatprep.subr.bf16.mxu0 %v2428
        %2715 = vmatpush2.bf16.msra.mxu0 %v2427
        %2716 = vmatprep.subr.bf16.mxu0 %v2424
        %2717 = vmatpush2.bf16.msra.mxu0 %v2423
        %2718 = vmatprep.subr.bf16.mxu0 %v2420
        %2719 = vmatpush2.bf16.msra.mxu0 %v2419
        %2720 = vmatprep.subr.bf16.mxu0 %v2416
        %2721 = vmatpush2.bf16.msra.mxu0 %v2415
        %2722 = vmatprep.subr.bf16.mxu0 %v2412
        %2723 = vmatpush2.bf16.msra.mxu0 %v2411
        %2724 = vmatprep.subr.bf16.mxu0 %v2408
        %2725 = vmatpush2.bf16.msra.mxu0 %v2407
        %2726 = vmatprep.mubr.bf16.mxu0 %v804
        %2727 = vmatmul.mubr.bf16.gmra.mxu0 %v803
        %v2728 = vpop.f32.mrf.mxu0
        %v2729 = vadd.f32 %v2686, %v2728
        %v2730 = vpop.f32.mrf.mxu0
        %v2731 = vadd.f32 %v2688, %v2730
        %v2732 = vpop.f32.mrf.mxu0
        %v2733 = vadd.f32 %v2690, %v2732
        %v2734 = vpop.f32.mrf.mxu0
        %v2735 = vadd.f32 %v2692, %v2734
        %2736 = vdwg.mxu0
        %v2737 = vmax.f32 %v2643, 0.0
        %v2738 = vmax.f32 %v2645, 0.0
        %v2739 = vmax.f32 %v2729, 0.0
        %v2740 = vmax.f32 %v2731, 0.0
        %v2741 = vmax.f32 %v2647, 0.0
        %v2742 = vmax.f32 %v2649, 0.0
        %v2743 = vmax.f32 %v2733, 0.0
        %v2744 = vmax.f32 %v2735, 0.0
        %v2745 = vpack.c.bf16 %v1771, %v1767
        %v2746 = vpack.c.bf16 %v1772, %v1768
        %v2747 = vpack.c.bf16 %v1773, %v1769
        %v2748 = vpack.c.bf16 %v1774, %v1770
        %v2749 = vld [vmem:[%s7] sm:$0xf]
        %v2750 = vld [vmem:[%s7 + $0x4] sm:$0xf]
        %v2751 = vld [vmem:[%s7 + $0x8] sm:$0xf]
        %v2752 = vld [vmem:[%s7 + $0xc] sm:$0xf]
        %v2753 = vld [vmem:[%s7 + $0x10] sm:$0xf]
        %v2754 = vld [vmem:[%s7 + $0x14] sm:$0xf]
        %v2755 = vld [vmem:[%s7 + $0x18] sm:$0xf]
        %v2756 = vld [vmem:[%s7 + $0x1c] sm:$0xf]
        %v2757 = vld [vmem:[%s7 + $0x20] sm:$0xf]
        %v2758 = vld [vmem:[%s7 + $0x24] sm:$0xf]
        %v2759 = vld [vmem:[%s7 + $0x28] sm:$0xf]
        %v2760 = vld [vmem:[%s7 + $0x2c] sm:$0xf]
        %v2761 = vld [vmem:[%s7 + $0x30] sm:$0xf]
        %v2762 = vld [vmem:[%s7 + $0x34] sm:$0xf]
        %v2763 = vld [vmem:[%s7 + $0x38] sm:$0xf]
        %v2764 = vld [vmem:[%s7 + $0x3c] sm:$0xf]
        %v2765 = vld [vmem:[%s7 + $0x40] sm:$0xf]
        %v2766 = vld [vmem:[%s7 + $0x44] sm:$0xf]
        %v2767 = vld [vmem:[%s7 + $0x48] sm:$0xf]
        %v2768 = vld [vmem:[%s7 + $0x4c] sm:$0xf]
        %v2769 = vld [vmem:[%s7 + $0x50] sm:$0xf]
        %v2770 = vld [vmem:[%s7 + $0x54] sm:$0xf]
        %v2771 = vld [vmem:[%s7 + $0x58] sm:$0xf]
        %v2772 = vld [vmem:[%s7 + $0x5c] sm:$0xf]
        %v2773 = vld [vmem:[%s7 + $0x60] sm:$0xf]
        %v2774 = vld [vmem:[%s7 + $0x64] sm:$0xf]
        %v2775 = vld [vmem:[%s7 + $0x68] sm:$0xf]
        %v2776 = vld [vmem:[%s7 + $0x6c] sm:$0xf]
        %v2777 = vld [vmem:[%s7 + $0x70] sm:$0xf]
        %v2778 = vld [vmem:[%s7 + $0x74] sm:$0xf]
        %v2779 = vld [vmem:[%s7 + $0x78] sm:$0xf]
        %v2780 = vld [vmem:[%s7 + $0x7c] sm:$0xf]
        %v2781 = vld [vmem:[%s7 + $0x80] sm:$0xf]
        %v2782 = vld [vmem:[%s7 + $0x84] sm:$0xf]
        %v2783 = vld [vmem:[%s7 + $0x88] sm:$0xf]
        %v2784 = vld [vmem:[%s7 + $0x8c] sm:$0xf]
        %v2785 = vld [vmem:[%s7 + $0x90] sm:$0xf]
        %v2786 = vld [vmem:[%s7 + $0x94] sm:$0xf]
        %v2787 = vld [vmem:[%s7 + $0x98] sm:$0xf]
        %v2788 = vld [vmem:[%s7 + $0x9c] sm:$0xf]
        %v2789 = vld [vmem:[%s7 + $0xa0] sm:$0xf]
        %v2790 = vld [vmem:[%s7 + $0xa4] sm:$0xf]
        %v2791 = vld [vmem:[%s7 + $0xa8] sm:$0xf]
        %v2792 = vld [vmem:[%s7 + $0xac] sm:$0xf]
        %v2793 = vld [vmem:[%s7 + $0xb0] sm:$0xf]
        %v2794 = vld [vmem:[%s7 + $0xb4] sm:$0xf]
        %v2795 = vld [vmem:[%s7 + $0xb8] sm:$0xf]
        %v2796 = vld [vmem:[%s7 + $0xbc] sm:$0xf]
        %v2797 = vld [vmem:[%s7 + $0xc0] sm:$0xf]
        %v2798 = vld [vmem:[%s7 + $0xc4] sm:$0xf]
        %v2799 = vld [vmem:[%s7 + $0xc8] sm:$0xf]
        %v2800 = vld [vmem:[%s7 + $0xcc] sm:$0xf]
        %v2801 = vld [vmem:[%s7 + $0xd0] sm:$0xf]
        %v2802 = vld [vmem:[%s7 + $0xd4] sm:$0xf]
        %v2803 = vld [vmem:[%s7 + $0xd8] sm:$0xf]
        %v2804 = vld [vmem:[%s7 + $0xdc] sm:$0xf]
        %v2805 = vld [vmem:[%s7 + $0xe0] sm:$0xf]
        %v2806 = vld [vmem:[%s7 + $0xe4] sm:$0xf]
        %v2807 = vld [vmem:[%s7 + $0xe8] sm:$0xf]
        %v2808 = vld [vmem:[%s7 + $0xec] sm:$0xf]
        %v2809 = vld [vmem:[%s7 + $0xf0] sm:$0xf]
        %v2810 = vld [vmem:[%s7 + $0xf4] sm:$0xf]
        %v2811 = vld [vmem:[%s7 + $0xf8] sm:$0xf]
        %v2812 = vld [vmem:[%s7 + $0xfc] sm:$0xf]
        %v2813 = vld [vmem:[#allocation2] sm:$0x1]
        %v2815 = vlaneseq
        %v2816 = vshrl.u32 %v2815, 7
        %v2817 = vsub.s32 0, %v2816
        %v2818 = vrot.slane %v2813, %v2817
        %v2884 = vunpack.c.l.b16 %v2749
        %v2885 = vunpack.c.l.b16 %v2750
        %v2886 = vunpack.c.l.b16 %v2751
        %v2887 = vunpack.c.l.b16 %v2752
        %v2888 = vunpack.c.l.b16 %v2753
        %v2889 = vunpack.c.l.b16 %v2754
        %v2890 = vunpack.c.l.b16 %v2755
        %v2891 = vunpack.c.l.b16 %v2756
        %v2892 = vunpack.c.l.b16 %v2757
        %v2893 = vunpack.c.l.b16 %v2758
        %v2894 = vunpack.c.l.b16 %v2759
        %v2895 = vunpack.c.l.b16 %v2760
        %v2896 = vunpack.c.l.b16 %v2761
        %v2897 = vunpack.c.l.b16 %v2762
        %v2898 = vunpack.c.l.b16 %v2763
        %v2899 = vunpack.c.l.b16 %v2764
        %v2900 = vunpack.c.l.b16 %v2765
        %v2901 = vunpack.c.l.b16 %v2766
        %v2902 = vunpack.c.l.b16 %v2767
        %v2903 = vunpack.c.l.b16 %v2768
        %v2904 = vunpack.c.l.b16 %v2769
        %v2905 = vunpack.c.l.b16 %v2770
        %v2906 = vunpack.c.l.b16 %v2771
        %v2907 = vunpack.c.l.b16 %v2772
        %v2908 = vunpack.c.l.b16 %v2773
        %v2909 = vunpack.c.l.b16 %v2774
        %v2910 = vunpack.c.l.b16 %v2775
        %v2911 = vunpack.c.l.b16 %v2776
        %v2912 = vunpack.c.l.b16 %v2777
        %v2913 = vunpack.c.l.b16 %v2778
        %v2914 = vunpack.c.l.b16 %v2779
        %v2915 = vunpack.c.l.b16 %v2780
        %v2916 = vunpack.c.l.b16 %v2781
        %v2917 = vunpack.c.l.b16 %v2782
        %v2918 = vunpack.c.l.b16 %v2783
        %v2919 = vunpack.c.l.b16 %v2784
        %v2920 = vunpack.c.l.b16 %v2785
        %v2921 = vunpack.c.l.b16 %v2786
        %v2922 = vunpack.c.l.b16 %v2787
        %v2923 = vunpack.c.l.b16 %v2788
        %v2924 = vunpack.c.l.b16 %v2789
        %v2925 = vunpack.c.l.b16 %v2790
        %v2926 = vunpack.c.l.b16 %v2791
        %v2927 = vunpack.c.l.b16 %v2792
        %v2928 = vunpack.c.l.b16 %v2793
        %v2929 = vunpack.c.l.b16 %v2794
        %v2930 = vunpack.c.l.b16 %v2795
        %v2931 = vunpack.c.l.b16 %v2796
        %v2932 = vunpack.c.l.b16 %v2797
        %v2933 = vunpack.c.l.b16 %v2798
        %v2934 = vunpack.c.l.b16 %v2799
        %v2935 = vunpack.c.l.b16 %v2800
        %v2936 = vunpack.c.l.b16 %v2801
        %v2937 = vunpack.c.l.b16 %v2802
        %v2938 = vunpack.c.l.b16 %v2803
        %v2939 = vunpack.c.l.b16 %v2804
        %v2940 = vunpack.c.l.b16 %v2805
        %v2941 = vunpack.c.l.b16 %v2806
        %v2942 = vunpack.c.l.b16 %v2807
        %v2943 = vunpack.c.l.b16 %v2808
        %v2944 = vunpack.c.l.b16 %v2809
        %v2945 = vunpack.c.l.b16 %v2810
        %v2946 = vunpack.c.l.b16 %v2811
        %v2947 = vunpack.c.l.b16 %v2812
        %v2948 = vpack.c.b16 %v2885, %v2884
        %v2949 = vpack.c.b16 %v2887, %v2886
        %v2950 = vpack.c.b16 %v2889, %v2888
        %v2951 = vpack.c.b16 %v2891, %v2890
        %v2952 = vpack.c.b16 %v2893, %v2892
        %v2953 = vpack.c.b16 %v2895, %v2894
        %v2954 = vpack.c.b16 %v2897, %v2896
        %v2955 = vpack.c.b16 %v2899, %v2898
        %v2956 = vpack.c.b16 %v2901, %v2900
        %v2957 = vpack.c.b16 %v2903, %v2902
        %v2958 = vpack.c.b16 %v2905, %v2904
        %v2959 = vpack.c.b16 %v2907, %v2906
        %v2960 = vpack.c.b16 %v2909, %v2908
        %v2961 = vpack.c.b16 %v2911, %v2910
        %v2962 = vpack.c.b16 %v2913, %v2912
        %v2963 = vpack.c.b16 %v2915, %v2914
        %v2964 = vpack.c.b16 %v2917, %v2916
        %v2965 = vpack.c.b16 %v2919, %v2918
        %v2966 = vpack.c.b16 %v2921, %v2920
        %v2967 = vpack.c.b16 %v2923, %v2922
        %v2968 = vpack.c.b16 %v2925, %v2924
        %v2969 = vpack.c.b16 %v2927, %v2926
        %v2970 = vpack.c.b16 %v2929, %v2928
        %v2971 = vpack.c.b16 %v2931, %v2930
        %v2972 = vpack.c.b16 %v2933, %v2932
        %v2973 = vpack.c.b16 %v2935, %v2934
        %v2974 = vpack.c.b16 %v2937, %v2936
        %v2975 = vpack.c.b16 %v2939, %v2938
        %v2976 = vpack.c.b16 %v2941, %v2940
        %v2977 = vpack.c.b16 %v2943, %v2942
        %v2978 = vpack.c.b16 %v2945, %v2944
        %v2979 = vpack.c.b16 %v2947, %v2946
        %3012 = vmatprep.subr.bf16.mxu0 0
        %3013 = vmatpush1.bf16.msra.mxu0 %v2955
        %3014 = vmatprep.subr.bf16.mxu0 0
        %3015 = vmatpush1.bf16.msra.mxu0 %v2954
        %3016 = vmatprep.subr.bf16.mxu0 0
        %3017 = vmatpush1.bf16.msra.mxu0 %v2953
        %3018 = vmatprep.subr.bf16.mxu0 0
        %3019 = vmatpush1.bf16.msra.mxu0 %v2952
        %3020 = vmatprep.subr.bf16.mxu0 0
        %3021 = vmatpush1.bf16.msra.mxu0 %v2951
        %3022 = vmatprep.subr.bf16.mxu0 0
        %3023 = vmatpush1.bf16.msra.mxu0 %v2950
        %3024 = vmatprep.subr.bf16.mxu0 0
        %3025 = vmatpush1.bf16.msra.mxu0 %v2949
        %3026 = vmatprep.subr.bf16.mxu0 0
        %3027 = vmatpush1.bf16.msra.mxu0 %v2948
        %3028 = vmatprep.subr.bf16.mxu0 0
        %3029 = vmatpush2.bf16.msra.mxu0 %v2963
        %3030 = vmatprep.subr.bf16.mxu0 0
        %3031 = vmatpush2.bf16.msra.mxu0 %v2962
        %3032 = vmatprep.subr.bf16.mxu0 0
        %3033 = vmatpush2.bf16.msra.mxu0 %v2961
        %3034 = vmatprep.subr.bf16.mxu0 0
        %3035 = vmatpush2.bf16.msra.mxu0 %v2960
        %3036 = vmatprep.subr.bf16.mxu0 0
        %3037 = vmatpush2.bf16.msra.mxu0 %v2959
        %3038 = vmatprep.subr.bf16.mxu0 0
        %3039 = vmatpush2.bf16.msra.mxu0 %v2958
        %3040 = vmatprep.subr.bf16.mxu0 0
        %3041 = vmatpush2.bf16.msra.mxu0 %v2957
        %3042 = vmatprep.subr.bf16.mxu0 0
        %3043 = vmatpush2.bf16.msra.mxu0 %v2956
        %3044 = vmatprep.mubr.bf16.mxu0 %v2746
        %3045 = vmatmul.mubr.bf16.gmra.mxu0 %v2745
        %v3046 = vpop.f32.mrf.mxu0
        %v3047 = vadd.f32 %v2818, %v3046
        %v3048 = vpop.f32.mrf.mxu0
        %v3049 = vpop.f32.mrf.mxu0
        %v3050 = vadd.f32 %v2818, %v3049
        %v3051 = vpop.f32.mrf.mxu0
        %3052 = vdwg.mxu0
        %3053 = vmatprep.subr.bf16.mxu0 0
        %3054 = vmatpush1.bf16.msra.mxu0 %v2971
        %3055 = vmatprep.subr.bf16.mxu0 0
        %3056 = vmatpush1.bf16.msra.mxu0 %v2970
        %3057 = vmatprep.subr.bf16.mxu0 0
        %3058 = vmatpush1.bf16.msra.mxu0 %v2969
        %3059 = vmatprep.subr.bf16.mxu0 0
        %3060 = vmatpush1.bf16.msra.mxu0 %v2968
        %3061 = vmatprep.subr.bf16.mxu0 0
        %3062 = vmatpush1.bf16.msra.mxu0 %v2967
        %3063 = vmatprep.subr.bf16.mxu0 0
        %3064 = vmatpush1.bf16.msra.mxu0 %v2966
        %3065 = vmatprep.subr.bf16.mxu0 0
        %3066 = vmatpush1.bf16.msra.mxu0 %v2965
        %3067 = vmatprep.subr.bf16.mxu0 0
        %3068 = vmatpush1.bf16.msra.mxu0 %v2964
        %3069 = vmatprep.subr.bf16.mxu0 0
        %3070 = vmatpush2.bf16.msra.mxu0 %v2979
        %3071 = vmatprep.subr.bf16.mxu0 0
        %3072 = vmatpush2.bf16.msra.mxu0 %v2978
        %3073 = vmatprep.subr.bf16.mxu0 0
        %3074 = vmatpush2.bf16.msra.mxu0 %v2977
        %3075 = vmatprep.subr.bf16.mxu0 0
        %3076 = vmatpush2.bf16.msra.mxu0 %v2976
        %3077 = vmatprep.subr.bf16.mxu0 0
        %3078 = vmatpush2.bf16.msra.mxu0 %v2975
        %3079 = vmatprep.subr.bf16.mxu0 0
        %3080 = vmatpush2.bf16.msra.mxu0 %v2974
        %3081 = vmatprep.subr.bf16.mxu0 0
        %3082 = vmatpush2.bf16.msra.mxu0 %v2973
        %3083 = vmatprep.subr.bf16.mxu0 0
        %3084 = vmatpush2.bf16.msra.mxu0 %v2972
        %3085 = vmatprep.mubr.bf16.mxu0 %v2748
        %3086 = vmatmul.mubr.bf16.gmra.mxu0 %v2747
        %v3087 = vpop.f32.mrf.mxu0
        %v3088 = vadd.f32 %v3047, %v3087
        %v3089 = vpop.f32.mrf.mxu0
        %v3090 = vpop.f32.mrf.mxu0
        %v3091 = vadd.f32 %v3050, %v3090
        %v3092 = vpop.f32.mrf.mxu0
        %3093 = vdwg.mxu0
        %v3094 = vpack.c.bf16 %v2741, %v2737
        %v3095 = vpack.c.bf16 %v2742, %v2738
        %v3096 = vpack.c.bf16 %v2743, %v2739
        %v3097 = vpack.c.bf16 %v2744, %v2740
        %v3098 = vld [vmem:[%s9] sm:$0xf]
        %v3099 = vld [vmem:[%s9 + $0x4] sm:$0xf]
        %v3100 = vld [vmem:[%s9 + $0x8] sm:$0xf]
        %v3101 = vld [vmem:[%s9 + $0xc] sm:$0xf]
        %v3102 = vld [vmem:[%s9 + $0x10] sm:$0xf]
        %v3103 = vld [vmem:[%s9 + $0x14] sm:$0xf]
        %v3104 = vld [vmem:[%s9 + $0x18] sm:$0xf]
        %v3105 = vld [vmem:[%s9 + $0x1c] sm:$0xf]
        %v3106 = vld [vmem:[%s9 + $0x20] sm:$0xf]
        %v3107 = vld [vmem:[%s9 + $0x24] sm:$0xf]
        %v3108 = vld [vmem:[%s9 + $0x28] sm:$0xf]
        %v3109 = vld [vmem:[%s9 + $0x2c] sm:$0xf]
        %v3110 = vld [vmem:[%s9 + $0x30] sm:$0xf]
        %v3111 = vld [vmem:[%s9 + $0x34] sm:$0xf]
        %v3112 = vld [vmem:[%s9 + $0x38] sm:$0xf]
        %v3113 = vld [vmem:[%s9 + $0x3c] sm:$0xf]
        %v3114 = vld [vmem:[%s9 + $0x40] sm:$0xf]
        %v3115 = vld [vmem:[%s9 + $0x44] sm:$0xf]
        %v3116 = vld [vmem:[%s9 + $0x48] sm:$0xf]
        %v3117 = vld [vmem:[%s9 + $0x4c] sm:$0xf]
        %v3118 = vld [vmem:[%s9 + $0x50] sm:$0xf]
        %v3119 = vld [vmem:[%s9 + $0x54] sm:$0xf]
        %v3120 = vld [vmem:[%s9 + $0x58] sm:$0xf]
        %v3121 = vld [vmem:[%s9 + $0x5c] sm:$0xf]
        %v3122 = vld [vmem:[%s9 + $0x60] sm:$0xf]
        %v3123 = vld [vmem:[%s9 + $0x64] sm:$0xf]
        %v3124 = vld [vmem:[%s9 + $0x68] sm:$0xf]
        %v3125 = vld [vmem:[%s9 + $0x6c] sm:$0xf]
        %v3126 = vld [vmem:[%s9 + $0x70] sm:$0xf]
        %v3127 = vld [vmem:[%s9 + $0x74] sm:$0xf]
        %v3128 = vld [vmem:[%s9 + $0x78] sm:$0xf]
        %v3129 = vld [vmem:[%s9 + $0x7c] sm:$0xf]
        %v3130 = vld [vmem:[%s9 + $0x80] sm:$0xf]
        %v3131 = vld [vmem:[%s9 + $0x84] sm:$0xf]
        %v3132 = vld [vmem:[%s9 + $0x88] sm:$0xf]
        %v3133 = vld [vmem:[%s9 + $0x8c] sm:$0xf]
        %v3134 = vld [vmem:[%s9 + $0x90] sm:$0xf]
        %v3135 = vld [vmem:[%s9 + $0x94] sm:$0xf]
        %v3136 = vld [vmem:[%s9 + $0x98] sm:$0xf]
        %v3137 = vld [vmem:[%s9 + $0x9c] sm:$0xf]
        %v3138 = vld [vmem:[%s9 + $0xa0] sm:$0xf]
        %v3139 = vld [vmem:[%s9 + $0xa4] sm:$0xf]
        %v3140 = vld [vmem:[%s9 + $0xa8] sm:$0xf]
        %v3141 = vld [vmem:[%s9 + $0xac] sm:$0xf]
        %v3142 = vld [vmem:[%s9 + $0xb0] sm:$0xf]
        %v3143 = vld [vmem:[%s9 + $0xb4] sm:$0xf]
        %v3144 = vld [vmem:[%s9 + $0xb8] sm:$0xf]
        %v3145 = vld [vmem:[%s9 + $0xbc] sm:$0xf]
        %v3146 = vld [vmem:[%s9 + $0xc0] sm:$0xf]
        %v3147 = vld [vmem:[%s9 + $0xc4] sm:$0xf]
        %v3148 = vld [vmem:[%s9 + $0xc8] sm:$0xf]
        %v3149 = vld [vmem:[%s9 + $0xcc] sm:$0xf]
        %v3150 = vld [vmem:[%s9 + $0xd0] sm:$0xf]
        %v3151 = vld [vmem:[%s9 + $0xd4] sm:$0xf]
        %v3152 = vld [vmem:[%s9 + $0xd8] sm:$0xf]
        %v3153 = vld [vmem:[%s9 + $0xdc] sm:$0xf]
        %v3154 = vld [vmem:[%s9 + $0xe0] sm:$0xf]
        %v3155 = vld [vmem:[%s9 + $0xe4] sm:$0xf]
        %v3156 = vld [vmem:[%s9 + $0xe8] sm:$0xf]
        %v3157 = vld [vmem:[%s9 + $0xec] sm:$0xf]
        %v3158 = vld [vmem:[%s9 + $0xf0] sm:$0xf]
        %v3159 = vld [vmem:[%s9 + $0xf4] sm:$0xf]
        %v3160 = vld [vmem:[%s9 + $0xf8] sm:$0xf]
        %v3161 = vld [vmem:[%s9 + $0xfc] sm:$0xf]
        %v3162 = vld [vmem:[%s10] sm:$0x1]
        %v3164 = vlaneseq
        %v3165 = vshrl.u32 %v3164, 7
        %v3166 = vsub.s32 0, %v3165
        %v3167 = vrot.slane %v3162, %v3166
        %v3233 = vunpack.c.l.b16 %v3098
        %v3234 = vunpack.c.l.b16 %v3099
        %v3235 = vunpack.c.l.b16 %v3100
        %v3236 = vunpack.c.l.b16 %v3101
        %v3237 = vunpack.c.l.b16 %v3102
        %v3238 = vunpack.c.l.b16 %v3103
        %v3239 = vunpack.c.l.b16 %v3104
        %v3240 = vunpack.c.l.b16 %v3105
        %v3241 = vunpack.c.l.b16 %v3106
        %v3242 = vunpack.c.l.b16 %v3107
        %v3243 = vunpack.c.l.b16 %v3108
        %v3244 = vunpack.c.l.b16 %v3109
        %v3245 = vunpack.c.l.b16 %v3110
        %v3246 = vunpack.c.l.b16 %v3111
        %v3247 = vunpack.c.l.b16 %v3112
        %v3248 = vunpack.c.l.b16 %v3113
        %v3249 = vunpack.c.l.b16 %v3114
        %v3250 = vunpack.c.l.b16 %v3115
        %v3251 = vunpack.c.l.b16 %v3116
        %v3252 = vunpack.c.l.b16 %v3117
        %v3253 = vunpack.c.l.b16 %v3118
        %v3254 = vunpack.c.l.b16 %v3119
        %v3255 = vunpack.c.l.b16 %v3120
        %v3256 = vunpack.c.l.b16 %v3121
        %v3257 = vunpack.c.l.b16 %v3122
        %v3258 = vunpack.c.l.b16 %v3123
        %v3259 = vunpack.c.l.b16 %v3124
        %v3260 = vunpack.c.l.b16 %v3125
        %v3261 = vunpack.c.l.b16 %v3126
        %v3262 = vunpack.c.l.b16 %v3127
        %v3263 = vunpack.c.l.b16 %v3128
        %v3264 = vunpack.c.l.b16 %v3129
        %v3265 = vunpack.c.l.b16 %v3130
        %v3266 = vunpack.c.l.b16 %v3131
        %v3267 = vunpack.c.l.b16 %v3132
        %v3268 = vunpack.c.l.b16 %v3133
        %v3269 = vunpack.c.l.b16 %v3134
        %v3270 = vunpack.c.l.b16 %v3135
        %v3271 = vunpack.c.l.b16 %v3136
        %v3272 = vunpack.c.l.b16 %v3137
        %v3273 = vunpack.c.l.b16 %v3138
        %v3274 = vunpack.c.l.b16 %v3139
        %v3275 = vunpack.c.l.b16 %v3140
        %v3276 = vunpack.c.l.b16 %v3141
        %v3277 = vunpack.c.l.b16 %v3142
        %v3278 = vunpack.c.l.b16 %v3143
        %v3279 = vunpack.c.l.b16 %v3144
        %v3280 = vunpack.c.l.b16 %v3145
        %v3281 = vunpack.c.l.b16 %v3146
        %v3282 = vunpack.c.l.b16 %v3147
        %v3283 = vunpack.c.l.b16 %v3148
        %v3284 = vunpack.c.l.b16 %v3149
        %v3285 = vunpack.c.l.b16 %v3150
        %v3286 = vunpack.c.l.b16 %v3151
        %v3287 = vunpack.c.l.b16 %v3152
        %v3288 = vunpack.c.l.b16 %v3153
        %v3289 = vunpack.c.l.b16 %v3154
        %v3290 = vunpack.c.l.b16 %v3155
        %v3291 = vunpack.c.l.b16 %v3156
        %v3292 = vunpack.c.l.b16 %v3157
        %v3293 = vunpack.c.l.b16 %v3158
        %v3294 = vunpack.c.l.b16 %v3159
        %v3295 = vunpack.c.l.b16 %v3160
        %v3296 = vunpack.c.l.b16 %v3161
        %v3297 = vpack.c.b16 %v3234, %v3233
        %v3298 = vpack.c.b16 %v3236, %v3235
        %v3299 = vpack.c.b16 %v3238, %v3237
        %v3300 = vpack.c.b16 %v3240, %v3239
        %v3301 = vpack.c.b16 %v3242, %v3241
        %v3302 = vpack.c.b16 %v3244, %v3243
        %v3303 = vpack.c.b16 %v3246, %v3245
        %v3304 = vpack.c.b16 %v3248, %v3247
        %v3305 = vpack.c.b16 %v3250, %v3249
        %v3306 = vpack.c.b16 %v3252, %v3251
        %v3307 = vpack.c.b16 %v3254, %v3253
        %v3308 = vpack.c.b16 %v3256, %v3255
        %v3309 = vpack.c.b16 %v3258, %v3257
        %v3310 = vpack.c.b16 %v3260, %v3259
        %v3311 = vpack.c.b16 %v3262, %v3261
        %v3312 = vpack.c.b16 %v3264, %v3263
        %v3313 = vpack.c.b16 %v3266, %v3265
        %v3314 = vpack.c.b16 %v3268, %v3267
        %v3315 = vpack.c.b16 %v3270, %v3269
        %v3316 = vpack.c.b16 %v3272, %v3271
        %v3317 = vpack.c.b16 %v3274, %v3273
        %v3318 = vpack.c.b16 %v3276, %v3275
        %v3319 = vpack.c.b16 %v3278, %v3277
        %v3320 = vpack.c.b16 %v3280, %v3279
        %v3321 = vpack.c.b16 %v3282, %v3281
        %v3322 = vpack.c.b16 %v3284, %v3283
        %v3323 = vpack.c.b16 %v3286, %v3285
        %v3324 = vpack.c.b16 %v3288, %v3287
        %v3325 = vpack.c.b16 %v3290, %v3289
        %v3326 = vpack.c.b16 %v3292, %v3291
        %v3327 = vpack.c.b16 %v3294, %v3293
        %v3328 = vpack.c.b16 %v3296, %v3295
        %3361 = vmatprep.subr.bf16.mxu0 0
        %3362 = vmatpush1.bf16.msra.mxu0 %v3304
        %3363 = vmatprep.subr.bf16.mxu0 0
        %3364 = vmatpush1.bf16.msra.mxu0 %v3303
        %3365 = vmatprep.subr.bf16.mxu0 0
        %3366 = vmatpush1.bf16.msra.mxu0 %v3302
        %3367 = vmatprep.subr.bf16.mxu0 0
        %3368 = vmatpush1.bf16.msra.mxu0 %v3301
        %3369 = vmatprep.subr.bf16.mxu0 0
        %3370 = vmatpush1.bf16.msra.mxu0 %v3300
        %3371 = vmatprep.subr.bf16.mxu0 0
        %3372 = vmatpush1.bf16.msra.mxu0 %v3299
        %3373 = vmatprep.subr.bf16.mxu0 0
        %3374 = vmatpush1.bf16.msra.mxu0 %v3298
        %3375 = vmatprep.subr.bf16.mxu0 0
        %3376 = vmatpush1.bf16.msra.mxu0 %v3297
        %3377 = vmatprep.subr.bf16.mxu0 0
        %3378 = vmatpush2.bf16.msra.mxu0 %v3312
        %3379 = vmatprep.subr.bf16.mxu0 0
        %3380 = vmatpush2.bf16.msra.mxu0 %v3311
        %3381 = vmatprep.subr.bf16.mxu0 0
        %3382 = vmatpush2.bf16.msra.mxu0 %v3310
        %3383 = vmatprep.subr.bf16.mxu0 0
        %3384 = vmatpush2.bf16.msra.mxu0 %v3309
        %3385 = vmatprep.subr.bf16.mxu0 0
        %3386 = vmatpush2.bf16.msra.mxu0 %v3308
        %3387 = vmatprep.subr.bf16.mxu0 0
        %3388 = vmatpush2.bf16.msra.mxu0 %v3307
        %3389 = vmatprep.subr.bf16.mxu0 0
        %3390 = vmatpush2.bf16.msra.mxu0 %v3306
        %3391 = vmatprep.subr.bf16.mxu0 0
        %3392 = vmatpush2.bf16.msra.mxu0 %v3305
        %3393 = vmatprep.mubr.bf16.mxu0 %v3095
        %3394 = vmatmul.mubr.bf16.gmra.mxu0 %v3094
        %v3395 = vpop.f32.mrf.mxu0
        %v3396 = vadd.f32 %v3167, %v3395
        %v3397 = vpop.f32.mrf.mxu0
        %v3398 = vpop.f32.mrf.mxu0
        %v3399 = vadd.f32 %v3167, %v3398
        %v3400 = vpop.f32.mrf.mxu0
        %3401 = vdwg.mxu0
        %3402 = vmatprep.subr.bf16.mxu0 0
        %3403 = vmatpush1.bf16.msra.mxu0 %v3320
        %3404 = vmatprep.subr.bf16.mxu0 0
        %3405 = vmatpush1.bf16.msra.mxu0 %v3319
        %3406 = vmatprep.subr.bf16.mxu0 0
        %3407 = vmatpush1.bf16.msra.mxu0 %v3318
        %3408 = vmatprep.subr.bf16.mxu0 0
        %3409 = vmatpush1.bf16.msra.mxu0 %v3317
        %3410 = vmatprep.subr.bf16.mxu0 0
        %3411 = vmatpush1.bf16.msra.mxu0 %v3316
        %3412 = vmatprep.subr.bf16.mxu0 0
        %3413 = vmatpush1.bf16.msra.mxu0 %v3315
        %3414 = vmatprep.subr.bf16.mxu0 0
        %3415 = vmatpush1.bf16.msra.mxu0 %v3314
        %3416 = vmatprep.subr.bf16.mxu0 0
        %3417 = vmatpush1.bf16.msra.mxu0 %v3313
        %3418 = vmatprep.subr.bf16.mxu0 0
        %3419 = vmatpush2.bf16.msra.mxu0 %v3328
        %3420 = vmatprep.subr.bf16.mxu0 0
        %3421 = vmatpush2.bf16.msra.mxu0 %v3327
        %3422 = vmatprep.subr.bf16.mxu0 0
        %3423 = vmatpush2.bf16.msra.mxu0 %v3326
        %3424 = vmatprep.subr.bf16.mxu0 0
        %3425 = vmatpush2.bf16.msra.mxu0 %v3325
        %3426 = vmatprep.subr.bf16.mxu0 0
        %3427 = vmatpush2.bf16.msra.mxu0 %v3324
        %3428 = vmatprep.subr.bf16.mxu0 0
        %3429 = vmatpush2.bf16.msra.mxu0 %v3323
        %3430 = vmatprep.subr.bf16.mxu0 0
        %3431 = vmatpush2.bf16.msra.mxu0 %v3322
        %3432 = vmatprep.subr.bf16.mxu0 0
        %3433 = vmatpush2.bf16.msra.mxu0 %v3321
        %3434 = vmatprep.mubr.bf16.mxu0 %v3097
        %3435 = vmatmul.mubr.bf16.gmra.mxu0 %v3096
        %v3436 = vpop.f32.mrf.mxu0
        %v3437 = vadd.f32 %v3396, %v3436
        %v3438 = vpop.f32.mrf.mxu0
        %v3439 = vpop.f32.mrf.mxu0
        %v3440 = vadd.f32 %v3399, %v3439
        %v3441 = vpop.f32.mrf.mxu0
        %3442 = vdwg.mxu0
        %vm3443 = vcmask 31744
        %3444 = vst.msk [vmem:[%s461] sm:$0xff] %vm3443, %v3437
        %3445 = vst.msk [vmem:[%s461 + $0x8] sm:$0xff] %vm3443, %v3440
        %3447 = vset.pattern.permute.xlu0 0
        %3448 = vperm.xlu0 %3447, %v3088
        %v3449 = vpop.permute.xlu0 %3448
        %3452 = vset.pattern.permute.xlu0 0
        %3453 = vperm.xlu0 %3452, %v3091
        %v3454 = vpop.permute.xlu0 %3453
        %v3456 = vadd.f32 %v3449, %v3437
        %v3457 = vadd.f32 %v3454, %v3440
        %3458 = vst.msk [vmem:[%s455] sm:$0xff] %vm3443, %v3456
        %3459 = vst.msk [vmem:[%s455 + $0x8] sm:$0xff] %vm3443, %v3457
        %s3460 = smul.u32 2, %s28
        %p3461 = scmp.lt.s32.totalorder %s3460, 3
        %s3462 = scalar_select %p3461, %s3460, 3
        %s3463 = smul.addr %s3462, 8
        %s3464 = scalar_lea.vmem %s11, %s3463
        %s3465 = smul.u32 2, %s28
        %p3466 = scmp.lt.s32.totalorder %s3465, 3
        %s3467 = scalar_select %p3466, %s3465, 3
        %s3468 = smul.addr %s3467, 8
        %s3469 = scalar_lea.vmem %s12, %s3468
        // Predicated region
        $region73: #{tpu_custom_call.1} parent=63 // pred_check
          %p3470 = pneg %p282
        $region74: #{tpu_custom_call.1} parent=63 // pred_check_branch
          %3472 = sbr.rel (%p3470) target = $region76
        $region75: #{tpu_custom_call.1} parent=63 // pred_region
          %s3473 = smul.u32 2, %s28
        $region76: #{tpu_custom_call.1} parent=63 // pred_fallthru
          _
        // Predicated region
        $region77: #{tpu_custom_call.1} parent=63 // pred_check
          %p3474 = pneg %p308
        $region78: #{tpu_custom_call.1} parent=63 // pred_check_branch
          %3476 = sbr.rel (%p3474) target = $region80
        $region79: #{tpu_custom_call.1} parent=63 // pred_region
          %s3477 = smul.u32 2, %s28
        $region80: #{tpu_custom_call.1} parent=63 // pred_fallthru
          _
      $region64: #{tpu_custom_call.1} parent=5 // pred_fallthru
        _
      %p3478 = scmp.le.s32.totalorder 2, %s23
      // Predicated region
      $region81: #{tpu_custom_call.1} parent=5 // pred_check
        %p3479 = pneg %p3478
      $region82: #{tpu_custom_call.1} parent=5 // pred_check_branch
        %3481 = sbr.rel (%p3479) target = $region84
      $region83: #{tpu_custom_call.1} parent=5 // pred_region
        %s3482 = ssub.s32 %s23, 2
        // Predicated region
        $region85: #{tpu_custom_call.1} parent=83 // pred_check
          %p3483 = pneg %p288
        $region86: #{tpu_custom_call.1} parent=83 // pred_check_branch
          %3485 = sbr.rel (%p3483) target = $region88
        $region87: #{tpu_custom_call.1} parent=83 // pred_region
          %s3486 = smul.u32 2, %s29
          %p3487 = scmp.lt.s32.totalorder %s3486, 3
          %s3488 = scalar_select %p3487, %s3486, 3
          %s3489 = smul.addr %s3488, 8
          %s3490 = scalar_lea.vmem %s11, %s3489
        $region88: #{tpu_custom_call.1} parent=83 // pred_fallthru
          _
        // Predicated region
        $region89: #{tpu_custom_call.1} parent=83 // pred_check
          %p3491 = pneg %p314
        $region90: #{tpu_custom_call.1} parent=83 // pred_check_branch
          %3493 = sbr.rel (%p3491) target = $region92
        $region91: #{tpu_custom_call.1} parent=83 // pred_region
          %s3494 = smul.u32 2, %s29
          %p3495 = scmp.lt.s32.totalorder %s3494, 3
          %s3496 = scalar_select %p3495, %s3494, 3
          %s3497 = smul.addr %s3496, 8
          %s3498 = scalar_lea.vmem %s12, %s3497
        $region92: #{tpu_custom_call.1} parent=83 // pred_fallthru
          _
      $region84: #{tpu_custom_call.1} parent=5 // pred_fallthru
        _
    $region6: #{tpu_custom_call.1} parent=1 // loop_footer
      %s27 = sadd.s32 1, %s23
    $region7: #{tpu_custom_call.1} parent=1 // loop_footer_branch
      %22 = sbr.rel target = $region3
    $region8: #{tpu_custom_call.1} parent=1 // loop_exit
      _
    %3499 = vsyncpa [#allocation4], 1
    %s3500 = scalar_lea.sflag [#allocation4], 1
    %3501 = vsyncpa %s3500, 1
    %3502 = vsyncpa [#allocation6], 1

</llo_original>
